<compile_context>
chip_gen: v6e
topology: v6e:2x2x1
jax: 0.10.0
libtpu: 0.0.40
codegen_flags: <defaults>
</compile_context>

<pallas_src>
import functools

import jax
import jax.numpy as jnp
from jax.experimental import pallas as pl
from jax.experimental.pallas import tpu as pltpu


def _round_up(x, m):
    return (x + m - 1) // m * m


# ---------------------------------------------------------------------------
# Kernel 1: per-edge update.  One grid step processes TE edges.
#   concat([src, dst, ef]) @ W computed with split weights; W* already holds
#   BOTH edge_model and attn_model columns ([*, 2*He]); result split in-register
#   for the sigmoid gate.  Two outputs: updated_ef (API dtype) and the message
#   copy in compute dtype for the node kernel to re-stream cheaply.
# ---------------------------------------------------------------------------
def _edge_update_kernel(src_ref, dst_ref, ef_ref,
                        ws_ref, wd_ref, we_ref, b_ref,
                        ef_out_ref, m_ref, *, half):
    fused = (jnp.dot(src_ref[...], ws_ref[...], preferred_element_type=jnp.float32)
             + jnp.dot(dst_ref[...], wd_ref[...], preferred_element_type=jnp.float32)
             + jnp.dot(ef_ref[...], we_ref[...], preferred_element_type=jnp.float32)
             + b_ref[...])                        # f32 accumulation + f32 bias
    e_out = fused[:, :half]                       # edge_model output
    gate = jax.nn.sigmoid(fused[:, half:])        # attn_model -> sigmoid (f32)
    m = gate * e_out
    ef_out_ref[...] = m.astype(ef_out_ref.dtype)
    m_ref[...] = m.astype(m_ref.dtype)


# ---------------------------------------------------------------------------
# Kernel 2: node update.  Grid = (node tiles, edge tiles), reduction axis last.
# Scatter-add of messages into an f32 VMEM accumulator via an in-register
# one-hot matmul in canonical (M,K)@(K,N) form, then node_model on finalize.
# ---------------------------------------------------------------------------
def _node_update_kernel(dst_ref, m_ref, nf_ref,
                        wa_ref, wn_ref, b_ref,
                        out_ref, acc_ref, *, compute_dtype):
    i = pl.program_id(0)            # node-tile index ("parallel")
    j = pl.program_id(1)            # edge-tile index (reduction, "arbitrary")
    tn = acc_ref.shape[0]

    @pl.when(j == 0)
    def _init():
        acc_ref[...] = jnp.zeros_like(acc_ref)

    # one-hot (tn, te): node ids along sublanes, edges along lanes (lane-dense dst).
    # Padded edges carry a sentinel dst >= N_pad, so they never match any row.
    node_ids = jax.lax.broadcasted_iota(jnp.int32, (tn, 1), 0) + i * tn
    onehot = (node_ids == dst_ref[...]).astype(compute_dtype)        # (tn, te)

    # acc[n, h] += sum_e onehot[n, e] * m[e, h]   (canonical MXU matmul)
    acc_ref[...] += jnp.dot(onehot, m_ref[...].astype(compute_dtype),
                            preferred_element_type=jnp.float32)

    @pl.when(j == pl.num_programs(1) - 1)
    def _finalize():
        agg = acc_ref[...].astype(compute_dtype)
        out = (jnp.dot(agg, wa_ref[...], preferred_element_type=jnp.float32)
               + jnp.dot(nf_ref[...], wn_ref[...], preferred_element_type=jnp.float32)
               + b_ref[...])
        out_ref[...] = out.astype(out_ref.dtype)


# ---------------------------------------------------------------------------
# Tile selection: blocks always fully cover the (padded) dim or satisfy the
# (8, 128) tiling constraint; keep >= 2 tiles on the parallel axes when the
# problem is large enough (v7x megacore).
# ---------------------------------------------------------------------------
def _pick_edge_tile(E, requested):
    if E <= requested:
        return _round_up(E, 8)                 # single tile covering all edges
    te = _round_up(requested, 128)             # lane-dense dst block -> 128-multiple
    half = _round_up(-(-E // 2), 128)
    return max(128, min(te, half))


def _pick_node_tile(N, requested):
    if N <= requested:
        return _round_up(N, 8)
    tn = _round_up(requested, 8)
    half = _round_up(-(-N // 2), 8)
    return max(8, min(tn, half))


def mpnn_forward(nf, ef, src_idx, dst_idx, params, *,
                 edge_tile=2048, node_tile=1024,
                 compute_dtype=jnp.bfloat16,
                 vmem_limit_bytes=None):
    """Pallas MPNN forward.
    nf: [N, Dn] f32, ef: [E, De] f32, src_idx/dst_idx: [E] int32.
    Returns (updated_nf [N, Hn], updated_ef [E, He])."""
    N, Dn = nf.shape
    E, De = ef.shape
    He = params["be"].shape[-1]
    Hn = params["bn"].shape[-1]
    out_dtype = nf.dtype
    cd = compute_dtype
    cd_size = jnp.dtype(cd).itemsize
    out_size = jnp.dtype(out_dtype).itemsize

    te = _pick_edge_tile(E, edge_tile)
    tn = _pick_node_tile(N, node_tile)
    E_pad = _round_up(E, te)
    N_pad = _round_up(N, tn)

    # Fold edge_model + attn_model into one matmul set (concat on output axis).
    w_s = jnp.concatenate([params["we_s"], params["wa_s"]], axis=1).astype(cd)
    w_d = jnp.concatenate([params["we_d"], params["wa_d"]], axis=1).astype(cd)
    w_e = jnp.concatenate([params["we_e"], params["wa_e"]], axis=1).astype(cd)
    b_ea = jnp.concatenate([params["be"], params["ba"]], axis=-1).astype(jnp.float32)

    nf_c = nf.astype(cd)
    ef_c = ef.astype(cd)
    # TODO(synk): replace this XLA gather glue with an in-kernel row gather of nf
    # driven by scalar-prefetched src/dst indices to cut ~2*E*Dn of HBM traffic.
    src_nf = jnp.take(nf_c, src_idx, axis=0)
    dst_nf = jnp.take(nf_c, dst_idx, axis=0)

    # Pad the edge dim to a multiple of te: zero features (padded messages stay
    # finite) and a sentinel destination >= N_pad (padded edges never scatter).
    pad_e = E_pad - E
    if pad_e:
        src_nf = jnp.pad(src_nf, ((0, pad_e), (0, 0)))
        dst_nf = jnp.pad(dst_nf, ((0, pad_e), (0, 0)))
        ef_c = jnp.pad(ef_c, ((0, pad_e), (0, 0)))
    dst_row = jnp.pad(dst_idx.astype(jnp.int32), (0, pad_e),
                      constant_values=N_pad).reshape(1, E_pad)

    # ------------------------- edge update kernel -------------------------
    edge_vmem = (2 * (te * (2 * Dn + De) * cd_size + te * He * (out_size + cd_size))
                 + 2 * ((2 * Dn + De) * 2 * He * cd_size + 2 * He * 4))
    edge_limit = vmem_limit_bytes or int(min(max(2 * edge_vmem, 16 << 20), 40 << 20))

    updated_ef_pad, m_pad = pl.pallas_call(
        functools.partial(_edge_update_kernel, half=He),
        out_shape=(jax.ShapeDtypeStruct((E_pad, He), out_dtype),
                   jax.ShapeDtypeStruct((E_pad, He), cd)),
        grid=(E_pad // te,),
        in_specs=[
            pl.BlockSpec((te, Dn), lambda i: (i, 0)),
            pl.BlockSpec((te, Dn), lambda i: (i, 0)),
            pl.BlockSpec((te, De), lambda i: (i, 0)),
            pl.BlockSpec((Dn, 2 * He), lambda i: (0, 0)),
            pl.BlockSpec((Dn, 2 * He), lambda i: (0, 0)),
            pl.BlockSpec((De, 2 * He), lambda i: (0, 0)),
            pl.BlockSpec((1, 2 * He), lambda i: (0, 0)),
        ],
        out_specs=(pl.BlockSpec((te, He), lambda i: (i, 0)),
                   pl.BlockSpec((te, He), lambda i: (i, 0))),
        compiler_params=pltpu.CompilerParams(
            dimension_semantics=("parallel",),
            vmem_limit_bytes=edge_limit),
    )(src_nf, dst_nf, ef_c, w_s, w_d, w_e, b_ea)

    # ------------------------- node update kernel -------------------------
    nf_node = nf_c if N_pad == N else jnp.pad(nf_c, ((0, N_pad - N), (0, 0)))
    wn_a = params["wn_a"].astype(cd)
    wn_n = params["wn_n"].astype(cd)
    bn = params["bn"].astype(jnp.float32)

    node_vmem = (2 * (te * 4 + te * He * cd_size + tn * Dn * cd_size + tn * Hn * out_size)
                 + 2 * ((He + Dn) * Hn * cd_size + Hn * 4) + tn * He * 4)
    node_limit = vmem_limit_bytes or int(min(max(2 * node_vmem, 16 << 20), 40 << 20))

    updated_nf_pad = pl.pallas_call(
        functools.partial(_node_update_kernel, compute_dtype=cd),
        out_shape=jax.ShapeDtypeStruct((N_pad, Hn), out_dtype),
        grid=(N_pad // tn, E_pad // te),
        in_specs=[
            pl.BlockSpec((1, te), lambda i, j: (0, j)),     # dst indices (lane-dense)
            pl.BlockSpec((te, He), lambda i, j: (j, 0)),    # messages m (compute dtype)
            pl.BlockSpec((tn, Dn), lambda i, j: (i, 0)),    # nf
            pl.BlockSpec((He, Hn), lambda i, j: (0, 0)),    # wn_a
            pl.BlockSpec((Dn, Hn), lambda i, j: (0, 0)),    # wn_n
            pl.BlockSpec((1, Hn), lambda i, j: (0, 0)),     # bn
        ],
        out_specs=pl.BlockSpec((tn, Hn), lambda i, j: (i, 0)),
        scratch_shapes=[pltpu.VMEM((tn, He), jnp.float32)],
        compiler_params=pltpu.CompilerParams(
            dimension_semantics=("parallel", "arbitrary"),
            vmem_limit_bytes=node_limit),
    )(dst_row, m_pad, nf_node, wn_a, wn_n, bn)

    updated_ef = updated_ef_pad[:E] if pad_e else updated_ef_pad
    updated_nf = updated_nf_pad[:N] if N_pad != N else updated_nf_pad
    return updated_nf, updated_ef


def mpnn_reference(nf, ef, src_idx, dst_idx, params):
    """Pure-JAX reference mirroring the PyTorch/DGL semantics (full f32)."""
    hp = jax.lax.Precision.HIGHEST
    src_nf = nf[src_idx]
    dst_nf = nf[dst_idx]
    x = jnp.concatenate([src_nf, dst_nf, ef], axis=-1)
    we = jnp.concatenate([params["we_s"], params["we_d"], params["we_e"]], axis=0)
    wa = jnp.concatenate([params["wa_s"], params["wa_d"], params["wa_e"]], axis=0)
    e_out = jnp.dot(x, we, precision=hp) + params["be"]
    a_e = jax.nn.sigmoid(jnp.dot(x, wa, precision=hp) + params["ba"])
    m = a_e * e_out
    N = nf.shape[0]
    agg = jnp.zeros((N, m.shape[-1]), m.dtype).at[dst_idx].add(m)
    wn = jnp.concatenate([params["wn_a"], params["wn_n"]], axis=0)
    upd_nf = jnp.dot(jnp.concatenate([agg, nf], axis=-1), wn, precision=hp) + params["bn"]
    return upd_nf, m


if __name__ == "__main__":
    # Small deterministic problem with lane-dense (128-wide) model outputs.
    N, E = 48, 256         # nodes / directed edges
    Dn, De = 64, 32        # node / edge feature dims
    He, Hn = 128, 128      # edge_model / node_model output dims

    key = jax.random.PRNGKey(0)
    ks = jax.random.split(key, 15)

    nf = jax.random.normal(ks[0], (N, Dn), jnp.float32)
    ef = jax.random.normal(ks[1], (E, De), jnp.float32)
    src_idx = jax.random.randint(ks[2], (E,), 0, N, dtype=jnp.int32)
    dst_idx = jax.random.randint(ks[3], (E,), 0, N, dtype=jnp.int32)

    def init_w(k, fan_in, fan_out):
        return jax.random.normal(k, (fan_in, fan_out), jnp.float32) / jnp.sqrt(fan_in)

    params = {
        # edge_model: Linear(2*Dn + De -> He), weight split along concat axis
        "we_s": init_w(ks[4], Dn, He),
        "we_d": init_w(ks[5], Dn, He),
        "we_e": init_w(ks[6], De, He),
        "be":   0.1 * jax.random.normal(ks[12], (1, He), jnp.float32),
        # attn_model: Linear(2*Dn + De -> He)
        "wa_s": init_w(ks[7], Dn, He),
        "wa_d": init_w(ks[8], Dn, He),
        "wa_e": init_w(ks[9], De, He),
        "ba":   0.1 * jax.random.normal(ks[13], (1, He), jnp.float32),
        # node_model: Linear(He + Dn -> Hn)
        "wn_a": init_w(ks[10], He, Hn),
        "wn_n": init_w(ks[11], Dn, Hn),
        "bn":   0.1 * jax.random.normal(ks[14], (1, Hn), jnp.float32),
    }

    ref_nf, ref_ef = mpnn_reference(nf, ef, src_idx, dst_idx, params)

    # 1) f32 operands, multi-tile grids: tight numerical check of kernel logic.
    fwd_f32 = jax.jit(functools.partial(
        mpnn_forward, edge_tile=128, node_tile=8, compute_dtype=jnp.float32))
    nf_f32, ef_f32 = fwd_f32(nf, ef, src_idx, dst_idx, params)
    jax.block_until_ready((nf_f32, ef_f32))
    assert jnp.allclose(ef_f32, ref_ef, atol=5e-4, rtol=5e-4)
    assert jnp.allclose(nf_f32, ref_nf, atol=5e-4, rtol=5e-4)

    # 2) f32 operands, default (large) tiles: single-tile / full-cover path.
    fwd_f32_big = jax.jit(functools.partial(
        mpnn_forward, compute_dtype=jnp.float32))
    nf_f32b, ef_f32b = fwd_f32_big(nf, ef, src_idx, dst_idx, params)
    jax.block_until_ready((nf_f32b, ef_f32b))
    assert jnp.allclose(ef_f32b, ref_ef, atol=5e-4, rtol=5e-4)
    assert jnp.allclose(nf_f32b, ref_nf, atol=5e-4, rtol=5e-4)

    # 3) perf path: bf16 MXU operands, f32 accumulation / elementwise.
    fwd_bf16 = jax.jit(functools.partial(
        mpnn_forward, edge_tile=128, node_tile=16, compute_dtype=jnp.bfloat16))
    nf_bf, ef_bf = fwd_bf16(nf, ef, src_idx, dst_idx, params)
    jax.block_until_ready((nf_bf, ef_bf))
    assert jnp.allclose(ef_bf, ref_ef, atol=2e-1, rtol=2e-1)
    assert jnp.allclose(nf_bf, ref_nf, atol=2e-1, rtol=2e-1)

    print("KERNEL_OK")
</pallas_src>

<mosaic_0001>
module attributes {stable_mosaic.version = 11 : i64} {
  func.func @_edge_update_kernel(%arg0: i32, %arg1: memref<128x64xf32, #tpu.memory_space<vmem>>, %arg2: memref<128x64xf32, #tpu.memory_space<vmem>>, %arg3: memref<128x32xf32, #tpu.memory_space<vmem>>, %arg4: memref<64x256xf32, #tpu.memory_space<vmem>>, %arg5: memref<64x256xf32, #tpu.memory_space<vmem>>, %arg6: memref<32x256xf32, #tpu.memory_space<vmem>>, %arg7: memref<1x256xf32, #tpu.memory_space<vmem>>, %arg8: memref<128x128xf32, #tpu.memory_space<vmem>>, %arg9: memref<128x128xf32, #tpu.memory_space<vmem>>) attributes {dimension_semantics = [#tpu.dimension_semantics<parallel>], iteration_bounds = array<i64: 2>, scalar_prefetch = 0 : i64, scratch_operands = 0 : i64, tpu.core_type = #tpu.core_type<tc>, window_params = [{transform_indices = @transform_0, window_bounds = array<i64: 128, 64>}, {transform_indices = @transform_1, window_bounds = array<i64: 128, 64>}, {transform_indices = @transform_2, window_bounds = array<i64: 128, 32>}, {pipeline_mode = #tpu.pipeline_mode<synchronous>, transform_indices = @transform_3, window_bounds = array<i64: 64, 256>}, {pipeline_mode = #tpu.pipeline_mode<synchronous>, transform_indices = @transform_4, window_bounds = array<i64: 64, 256>}, {pipeline_mode = #tpu.pipeline_mode<synchronous>, transform_indices = @transform_5, window_bounds = array<i64: 32, 256>}, {pipeline_mode = #tpu.pipeline_mode<synchronous>, transform_indices = @transform_6, window_bounds = array<i64: 1, 256>}, {transform_indices = @transform_7, window_bounds = array<i64: 128, 128>}, {transform_indices = @transform_8, window_bounds = array<i64: 128, 128>}]} {
    %c0 = arith.constant 0 : index
    %c0_0 = arith.constant 0 : index
    %0 = vector.load %arg1[%c0, %c0_0] : memref<128x64xf32, #tpu.memory_space<vmem>>, vector<128x64xf32>
    %c0_1 = arith.constant 0 : index
    %c0_2 = arith.constant 0 : index
    %1 = vector.load %arg4[%c0_1, %c0_2] : memref<64x256xf32, #tpu.memory_space<vmem>>, vector<64x256xf32>
    %cst = arith.constant dense<0.000000e+00> : vector<128x256xf32>
    %2 = tpu.matmul %0, %1, %cst {dimension_numbers = #tpu.dot_dimension_numbers<[1], [0], [0], [1], [0, 0, 1, 1], [], []>} : vector<128x64xf32>, vector<64x256xf32>, vector<128x256xf32> -> vector<128x256xf32>
    %c0_3 = arith.constant 0 : index
    %c0_4 = arith.constant 0 : index
    %3 = vector.load %arg2[%c0_3, %c0_4] : memref<128x64xf32, #tpu.memory_space<vmem>>, vector<128x64xf32>
    %c0_5 = arith.constant 0 : index
    %c0_6 = arith.constant 0 : index
    %4 = vector.load %arg5[%c0_5, %c0_6] : memref<64x256xf32, #tpu.memory_space<vmem>>, vector<64x256xf32>
    %cst_7 = arith.constant dense<0.000000e+00> : vector<128x256xf32>
    %5 = tpu.matmul %3, %4, %cst_7 {dimension_numbers = #tpu.dot_dimension_numbers<[1], [0], [0], [1], [0, 0, 1, 1], [], []>} : vector<128x64xf32>, vector<64x256xf32>, vector<128x256xf32> -> vector<128x256xf32>
    %6 = arith.addf %2, %5 : vector<128x256xf32>
    %c0_8 = arith.constant 0 : index
    %c0_9 = arith.constant 0 : index
    %7 = vector.load %arg3[%c0_8, %c0_9] : memref<128x32xf32, #tpu.memory_space<vmem>>, vector<128x32xf32>
    %c0_10 = arith.constant 0 : index
    %c0_11 = arith.constant 0 : index
    %8 = vector.load %arg6[%c0_10, %c0_11] : memref<32x256xf32, #tpu.memory_space<vmem>>, vector<32x256xf32>
    %cst_12 = arith.constant dense<0.000000e+00> : vector<128x256xf32>
    %9 = tpu.matmul %7, %8, %cst_12 {dimension_numbers = #tpu.dot_dimension_numbers<[1], [0], [0], [1], [0, 0, 1, 1], [], []>} : vector<128x32xf32>, vector<32x256xf32>, vector<128x256xf32> -> vector<128x256xf32>
    %10 = arith.addf %6, %9 : vector<128x256xf32>
    %c0_13 = arith.constant 0 : index
    %c0_14 = arith.constant 0 : index
    %11 = vector.load %arg7[%c0_13, %c0_14] : memref<1x256xf32, #tpu.memory_space<vmem>>, vector<1x256xf32>
    %12 = vector.broadcast %11 : vector<1x256xf32> to vector<128x256xf32>
    %13 = arith.addf %10, %12 : vector<128x256xf32>
    %14 = vector.extract_strided_slice %13 {offsets = [0, 0], sizes = [128, 128], strides = [1, 1]} : vector<128x256xf32> to vector<128x128xf32>
    %15 = vector.extract_strided_slice %13 {offsets = [0, 128], sizes = [128, 128], strides = [1, 1]} : vector<128x256xf32> to vector<128x128xf32>
    %16 = arith.negf %15 : vector<128x128xf32>
    %17 = math.exp %16 : vector<128x128xf32>
    %cst_15 = arith.constant 1.000000e+00 : f32
    %18 = vector.broadcast %cst_15 : f32 to vector<128x128xf32>
    %19 = arith.addf %18, %17 : vector<128x128xf32>
    %20 = arith.divf %18, %19 : vector<128x128xf32>
    %21 = arith.mulf %20, %14 : vector<128x128xf32>
    %c0_16 = arith.constant 0 : index
    %c0_17 = arith.constant 0 : index
    %22 = vector.load %arg8[%c0_16, %c0_17] : memref<128x128xf32, #tpu.memory_space<vmem>>, vector<128x128xf32>
    tpu.vector_store %arg8[%c0_16, %c0_17], %21 {strides = array<i32>} : memref<128x128xf32, #tpu.memory_space<vmem>>, vector<128x128xf32>,
    %c0_18 = arith.constant 0 : index
    %c0_19 = arith.constant 0 : index
    %23 = vector.load %arg9[%c0_18, %c0_19] : memref<128x128xf32, #tpu.memory_space<vmem>>, vector<128x128xf32>
    tpu.vector_store %arg9[%c0_18, %c0_19], %21 {strides = array<i32>} : memref<128x128xf32, #tpu.memory_space<vmem>>, vector<128x128xf32>,
    return
  }
  func.func @transform_0(%arg0: i32) -> (i32, i32) {
    %c0_i32 = arith.constant 0 : i32
    %c0_i32_0 = arith.constant 0 : i32
    return %arg0, %c0_i32 : i32, i32
  }
  func.func @transform_1(%arg0: i32) -> (i32, i32) {
    %c0_i32 = arith.constant 0 : i32
    %c0_i32_0 = arith.constant 0 : i32
    return %arg0, %c0_i32 : i32, i32
  }
  func.func @transform_2(%arg0: i32) -> (i32, i32) {
    %c0_i32 = arith.constant 0 : i32
    %c0_i32_0 = arith.constant 0 : i32
    return %arg0, %c0_i32 : i32, i32
  }
  func.func @transform_3(%arg0: i32) -> (i32, i32) {
    %c0_i32 = arith.constant 0 : i32
    %c0_i32_0 = arith.constant 0 : i32
    %c0_i32_1 = arith.constant 0 : i32
    return %c0_i32, %c0_i32_0 : i32, i32
  }
  func.func @transform_4(%arg0: i32) -> (i32, i32) {
    %c0_i32 = arith.constant 0 : i32
    %c0_i32_0 = arith.constant 0 : i32
    %c0_i32_1 = arith.constant 0 : i32
    return %c0_i32, %c0_i32_0 : i32, i32
  }
  func.func @transform_5(%arg0: i32) -> (i32, i32) {
    %c0_i32 = arith.constant 0 : i32
    %c0_i32_0 = arith.constant 0 : i32
    %c0_i32_1 = arith.constant 0 : i32
    return %c0_i32, %c0_i32_0 : i32, i32
  }
  func.func @transform_6(%arg0: i32) -> (i32, i32) {
    %c0_i32 = arith.constant 0 : i32
    %c0_i32_0 = arith.constant 0 : i32
    %c0_i32_1 = arith.constant 0 : i32
    return %c0_i32, %c0_i32_0 : i32, i32
  }
  func.func @transform_7(%arg0: i32) -> (i32, i32) {
    %c0_i32 = arith.constant 0 : i32
    %c0_i32_0 = arith.constant 0 : i32
    return %arg0, %c0_i32 : i32, i32
  }
  func.func @transform_8(%arg0: i32) -> (i32, i32) {
    %c0_i32 = arith.constant 0 : i32
    %c0_i32_0 = arith.constant 0 : i32
    return %arg0, %c0_i32 : i32, i32
  }
}

module attributes {stable_mosaic.version = 11 : i64} {
  func.func @_node_update_kernel(%arg0: i32, %arg1: i32, %arg2: memref<1x128xi32, #tpu.memory_space<vmem>>, %arg3: memref<128x128xf32, #tpu.memory_space<vmem>>, %arg4: memref<8x64xf32, #tpu.memory_space<vmem>>, %arg5: memref<128x128xf32, #tpu.memory_space<vmem>>, %arg6: memref<64x128xf32, #tpu.memory_space<vmem>>, %arg7: memref<1x128xf32, #tpu.memory_space<vmem>>, %arg8: memref<8x128xf32, #tpu.memory_space<vmem>>, %arg9: memref<8x128xf32, #tpu.memory_space<vmem>>) attributes {dimension_semantics = [#tpu.dimension_semantics<parallel>, #tpu.dimension_semantics<arbitrary>], iteration_bounds = array<i64: 6, 2>, scalar_prefetch = 0 : i64, scratch_operands = 1 : i64, tpu.core_type = #tpu.core_type<tc>, window_params = [{transform_indices = @transform_0, window_bounds = array<i64: 1, 128>}, {transform_indices = @transform_1, window_bounds = array<i64: 128, 128>}, {transform_indices = @transform_2, window_bounds = array<i64: 8, 64>}, {pipeline_mode = #tpu.pipeline_mode<synchronous>, transform_indices = @transform_3, window_bounds = array<i64: 128, 128>}, {pipeline_mode = #tpu.pipeline_mode<synchronous>, transform_indices = @transform_4, window_bounds = array<i64: 64, 128>}, {pipeline_mode = #tpu.pipeline_mode<synchronous>, transform_indices = @transform_5, window_bounds = array<i64: 1, 128>}, {transform_indices = @transform_6, window_bounds = array<i64: 8, 128>}]} {
    %c0_i32 = arith.constant 0 : i32
    %0 = arith.cmpi eq, %arg1, %c0_i32 : i32
    %1 = arith.extui %0 : i1 to i32
    %c0_i32_0 = arith.constant 0 : i32
    %2 = arith.cmpi ne, %1, %c0_i32_0 : i32
    scf.if %2 {
      %cst_9 = arith.constant 0.000000e+00 : f32
      %21 = vector.broadcast %cst_9 : f32 to vector<8x128xf32>
      %c0_10 = arith.constant 0 : index
      %c0_11 = arith.constant 0 : index
      %22 = vector.load %arg9[%c0_10, %c0_11] : memref<8x128xf32, #tpu.memory_space<vmem>>, vector<8x128xf32>
      tpu.vector_store %arg9[%c0_10, %c0_11], %21 {strides = array<i32>} : memref<8x128xf32, #tpu.memory_space<vmem>>, vector<8x128xf32>,
    } else {
    }
    %3 = tpu.iota {dimensions = array<i32: 0>} : vector<8x1xi32>
    %c8_i32 = arith.constant 8 : i32
    %4 = arith.muli %arg0, %c8_i32 : i32
    %5 = vector.broadcast %4 : i32 to vector<8x1xi32>
    %6 = arith.addi %3, %5 : vector<8x1xi32>
    %c0 = arith.constant 0 : index
    %c0_1 = arith.constant 0 : index
    %7 = vector.load %arg2[%c0, %c0_1] : memref<1x128xi32, #tpu.memory_space<vmem>>, vector<1x128xi32>
    %8 = vector.broadcast %6 : vector<8x1xi32> to vector<8x128xi32>
    %9 = vector.broadcast %7 : vector<1x128xi32> to vector<8x128xi32>
    %10 = arith.cmpi eq, %8, %9 : vector<8x128xi32>
    %11 = arith.extui %10 : vector<8x128xi1> to vector<8x128xi32>
    %12 = arith.sitofp %11 : vector<8x128xi32> to vector<8x128xf32>
    %c0_2 = arith.constant 0 : index
    %c0_3 = arith.constant 0 : index
    %13 = vector.load %arg9[%c0_2, %c0_3] : memref<8x128xf32, #tpu.memory_space<vmem>>, vector<8x128xf32>
    %c0_4 = arith.constant 0 : index
    %c0_5 = arith.constant 0 : index
    %14 = vector.load %arg3[%c0_4, %c0_5] : memref<128x128xf32, #tpu.memory_space<vmem>>, vector<128x128xf32>
    %cst = arith.constant dense<0.000000e+00> : vector<8x128xf32>
    %15 = tpu.matmul %12, %14, %cst {dimension_numbers = #tpu.dot_dimension_numbers<[1], [0], [0], [1], [0, 0, 1, 1], [], []>} : vector<8x128xf32>, vector<128x128xf32>, vector<8x128xf32> -> vector<8x128xf32>
    %16 = arith.addf %13, %15 : vector<8x128xf32>
    %c0_6 = arith.constant 0 : index
    %c0_7 = arith.constant 0 : index
    %17 = vector.load %arg9[%c0_6, %c0_7] : memref<8x128xf32, #tpu.memory_space<vmem>>, vector<8x128xf32>
    tpu.vector_store %arg9[%c0_6, %c0_7], %16 {strides = array<i32>} : memref<8x128xf32, #tpu.memory_space<vmem>>, vector<8x128xf32>,
    %c1_i32 = arith.constant 1 : i32
    %18 = arith.cmpi eq, %arg1, %c1_i32 : i32
    %19 = arith.extui %18 : i1 to i32
    %c0_i32_8 = arith.constant 0 : i32
    %20 = arith.cmpi ne, %19, %c0_i32_8 : i32
    scf.if %20 {
      %c0_9 = arith.constant 0 : index
      %c0_10 = arith.constant 0 : index
      %21 = vector.load %arg9[%c0_9, %c0_10] : memref<8x128xf32, #tpu.memory_space<vmem>>, vector<8x128xf32>
      %c0_11 = arith.constant 0 : index
      %c0_12 = arith.constant 0 : index
      %22 = vector.load %arg5[%c0_11, %c0_12] : memref<128x128xf32, #tpu.memory_space<vmem>>, vector<128x128xf32>
      %cst_13 = arith.constant dense<0.000000e+00> : vector<8x128xf32>
      %23 = tpu.matmul %21, %22, %cst_13 {dimension_numbers = #tpu.dot_dimension_numbers<[1], [0], [0], [1], [0, 0, 1, 1], [], []>} : vector<8x128xf32>, vector<128x128xf32>, vector<8x128xf32> -> vector<8x128xf32>
      %c0_14 = arith.constant 0 : index
      %c0_15 = arith.constant 0 : index
      %24 = vector.load %arg4[%c0_14, %c0_15] : memref<8x64xf32, #tpu.memory_space<vmem>>, vector<8x64xf32>
      %c0_16 = arith.constant 0 : index
      %c0_17 = arith.constant 0 : index
      %25 = vector.load %arg6[%c0_16, %c0_17] : memref<64x128xf32, #tpu.memory_space<vmem>>, vector<64x128xf32>
      %cst_18 = arith.constant dense<0.000000e+00> : vector<8x128xf32>
      %26 = tpu.matmul %24, %25, %cst_18 {dimension_numbers = #tpu.dot_dimension_numbers<[1], [0], [0], [1], [0, 0, 1, 1], [], []>} : vector<8x64xf32>, vector<64x128xf32>, vector<8x128xf32> -> vector<8x128xf32>
      %27 = arith.addf %23, %26 : vector<8x128xf32>
      %c0_19 = arith.constant 0 : index
      %c0_20 = arith.constant 0 : index
      %28 = vector.load %arg7[%c0_19, %c0_20] : memref<1x128xf32, #tpu.memory_space<vmem>>, vector<1x128xf32>
      %29 = vector.broadcast %28 : vector<1x128xf32> to vector<8x128xf32>
      %30 = arith.addf %27, %29 : vector<8x128xf32>
      %c0_21 = arith.constant 0 : index
      %c0_22 = arith.constant 0 : index
      %31 = vector.load %arg8[%c0_21, %c0_22] : memref<8x128xf32, #tpu.memory_space<vmem>>, vector<8x128xf32>
      tpu.vector_store %arg8[%c0_21, %c0_22], %30 {strides = array<i32>} : memref<8x128xf32, #tpu.memory_space<vmem>>, vector<8x128xf32>,
    } else {
    }
    return
  }
  func.func @transform_0(%arg0: i32, %arg1: i32) -> (i32, i32) {
    %c0_i32 = arith.constant 0 : i32
    %c0_i32_0 = arith.constant 0 : i32
    return %c0_i32, %arg1 : i32, i32
  }
  func.func @transform_1(%arg0: i32, %arg1: i32) -> (i32, i32) {
    %c0_i32 = arith.constant 0 : i32
    %c0_i32_0 = arith.constant 0 : i32
    return %arg1, %c0_i32 : i32, i32
  }
  func.func @transform_2(%arg0: i32, %arg1: i32) -> (i32, i32) {
    %c0_i32 = arith.constant 0 : i32
    %c0_i32_0 = arith.constant 0 : i32
    return %arg0, %c0_i32 : i32, i32
  }
  func.func @transform_3(%arg0: i32, %arg1: i32) -> (i32, i32) {
    %c0_i32 = arith.constant 0 : i32
    %c0_i32_0 = arith.constant 0 : i32
    %c0_i32_1 = arith.constant 0 : i32
    return %c0_i32, %c0_i32_0 : i32, i32
  }
  func.func @transform_4(%arg0: i32, %arg1: i32) -> (i32, i32) {
    %c0_i32 = arith.constant 0 : i32
    %c0_i32_0 = arith.constant 0 : i32
    %c0_i32_1 = arith.constant 0 : i32
    return %c0_i32, %c0_i32_0 : i32, i32
  }
  func.func @transform_5(%arg0: i32, %arg1: i32) -> (i32, i32) {
    %c0_i32 = arith.constant 0 : i32
    %c0_i32_0 = arith.constant 0 : i32
    %c0_i32_1 = arith.constant 0 : i32
    return %c0_i32, %c0_i32_0 : i32, i32
  }
  func.func @transform_6(%arg0: i32, %arg1: i32) -> (i32, i32) {
    %c0_i32 = arith.constant 0 : i32
    %c0_i32_0 = arith.constant 0 : i32
    return %arg0, %c0_i32 : i32, i32
  }
}

</mosaic_0001>

<llo_original>
// kernel: mpnn_forward.3
$region0: #{mpnn_forward.3}
  #allocation0 [shape = 'u32[]', space=smem, size = 0x4, offset = 0x4, fixed_abs, tag = 'smem constant byte address 0x4 - core index']
  #allocation1 [shape = 'u32[144,128]{1,0:T(1,128)}', space=vmem, size = 0x12000, scoped, tag = 'internal scratch']
  #allocation2 [shape = 'f32[8,128]{1,0:T(8,128)}', space=vmem, size = 0x1000, scoped, tag = 'scratch operand']
  %s0 = inlined_call_operand.vmem [shape: s32[1,256], index: 0, kind: input, shape index: {}]
  %s1 = inlined_call_operand.vmem [shape: f32[256,128], index: 1, kind: input, shape index: {}]
  %s2 = inlined_call_operand.vmem [shape: f32[48,64], index: 2, kind: input, shape index: {}]
  %s3 = inlined_call_operand.vmem [shape: f32[128,128], index: 3, kind: input, shape index: {}]
  %s4 = inlined_call_operand.vmem [shape: f32[64,128], index: 4, kind: input, shape index: {}]
  %s5 = inlined_call_operand.vmem [shape: f32[1,128], index: 5, kind: input, shape index: {}]
  %s6 = inlined_call_operand.hbm [shape: f32[48,128], index: 6, kind: output, shape index: {}]
  %s7 = sld [smem:[#allocation0]]
  $region65: #{mpnn_forward.3} parent=0
    _
  %s9 = ssub.s32 1, %s7
  %s10 = scalar_select 0, %s9, %s7
  $region1: #{mpnn_forward.3} parent=0
    #allocation3 [shape = 'u8[8192]{0}', space=vmem, size = 0x2000, scoped, tag = 'output window, operand 0']
    #allocation4 [shape = 's32[2]{0}', space=sflag, size = 0x8, scoped, tag = 'scoped memory for mpnn_forward.3']
    %11 = vsyncpa [#allocation4], 0
    %s12 = scalar_lea.sflag [#allocation4], 1
    %13 = vsyncpa %s12, 0
    loop: start=0, step=1, limit=14
    $region2: #{mpnn_forward.3} parent=1 // loop_pre_header
      _
    $region3: #{mpnn_forward.3} parent=1 // loop_header
      %s15 = sphi 0, %s19
      %p16 = scmp.ge.s32.totalorder %s15, 14
      %s22 = sphi 0, %s34
      %s23 = sphi 0, %s30
      %s24 = sphi 0, %s22
      %s25 = sphi 0, %s23
      %s26 = sphi 0, %s24
      %s27 = sphi 0, %s25
      %s37 = sphi 0, %s39
      %s40 = sphi 0, %s37
      %s41 = sphi 0, %s40
      %s57 = sphi 0, %s41
      %s63 = sphi 0, %s65
      %s66 = sphi 0, %s63
      %s67 = sphi 0, %s66
      %s83 = sphi 0, %s67
      %s89 = sphi 0, %s91
      %s92 = sphi 0, %s89
      %s93 = sphi 0, %s92
      %s109 = sphi 0, %s93
      %s113 = sphi 0, %s113
      %s115 = sphi 0, %s113
      %s116 = sphi 0, %s115
      %s130 = sphi 0, %s116
      %s134 = sphi 0, %s134
      %s136 = sphi 0, %s134
      %s137 = sphi 0, %s136
      %s151 = sphi 0, %s137
      %s155 = sphi 0, %s155
      %s157 = sphi 0, %s155
      %s158 = sphi 0, %s157
      %s172 = sphi 0, %s158
      %s178 = sphi 0, %s180
      %s181 = sphi 0, %s178
      %s182 = sphi 0, %s181
      %s198 = sphi 0, %s182
    $region4: #{mpnn_forward.3} parent=1 // loop_header_branch
      %18 = sbr.rel (%p16) target = $region8
    $region5: #{mpnn_forward.3} parent=1 // loop_body
      %s20 = ssub.s32 %s15, 1
      %s21 = ssub.s32 %s15, 2
      %s28 = sadd.s32 1, %s23
      %p29 = scmp.ge.s32.totalorder %s28, 2
      %s30 = scalar_select %p29, 0, %s28
      %s31 = sadd.s32 1, %s22
      %s32 = scalar_select %p29, %s31, %s22
      %p33 = scmp.ge.s32.totalorder %s32, 6
      %s34 = scalar_select %p33, 0, %s32
      %s35 = ssub.s32 %s23, %s30
      %p36 = scmp.eq.s32.totalorder %s35, 0
      %s38 = sadd.s32 %s37, 1
      %s39 = scalar_select %p36, %s37, %s38
      %p42 = pneg %p36
      %p43 = scmp.eq.s32.totalorder %s15, 11
      %p44 = por %p42, %p43
      %p45 = scmp.ne.s32.totalorder %s37, %s40
      %p46 = scmp.eq.s32.totalorder %s15, 0
      %p47 = por %p45, %p46
      %p48 = scmp.ne.s32.totalorder %s37, %s40
      %p49 = scmp.eq.s32.totalorder %s20, 11
      %p50 = por %p48, %p49
      %p51 = scmp.ne.s32.totalorder %s40, %s41
      %p52 = scmp.eq.s32.totalorder %s20, 0
      %p53 = por %p51, %p52
      %p54 = scmp.ne.s32.totalorder %s40, %s41
      %p55 = scmp.eq.s32.totalorder %s21, 11
      %p56 = por %p54, %p55
      %p58 = scmp.ne.s32.totalorder %s41, %s57
      %p59 = scmp.eq.s32.totalorder %s21, 0
      %p60 = por %p58, %p59
      %s61 = ssub.s32 %s23, %s30
      %p62 = scmp.eq.s32.totalorder %s61, 0
      %s64 = sadd.s32 %s63, 1
      %s65 = scalar_select %p62, %s63, %s64
      %p68 = pneg %p62
      %p69 = scmp.eq.s32.totalorder %s15, 11
      %p70 = por %p68, %p69
      %p71 = scmp.ne.s32.totalorder %s63, %s66
      %p72 = scmp.eq.s32.totalorder %s15, 0
      %p73 = por %p71, %p72
      %p74 = scmp.ne.s32.totalorder %s63, %s66
      %p75 = scmp.eq.s32.totalorder %s20, 11
      %p76 = por %p74, %p75
      %p77 = scmp.ne.s32.totalorder %s66, %s67
      %p78 = scmp.eq.s32.totalorder %s20, 0
      %p79 = por %p77, %p78
      %p80 = scmp.ne.s32.totalorder %s66, %s67
      %p81 = scmp.eq.s32.totalorder %s21, 11
      %p82 = por %p80, %p81
      %p84 = scmp.ne.s32.totalorder %s67, %s83
      %p85 = scmp.eq.s32.totalorder %s21, 0
      %p86 = por %p84, %p85
      %s87 = ssub.s32 %s22, %s34
      %p88 = scmp.eq.s32.totalorder %s87, 0
      %s90 = sadd.s32 %s89, 1
      %s91 = scalar_select %p88, %s89, %s90
      %p94 = pneg %p88
      %p95 = scmp.eq.s32.totalorder %s15, 11
      %p96 = por %p94, %p95
      %p97 = scmp.ne.s32.totalorder %s89, %s92
      %p98 = scmp.eq.s32.totalorder %s15, 0
      %p99 = por %p97, %p98
      %p100 = scmp.ne.s32.totalorder %s89, %s92
      %p101 = scmp.eq.s32.totalorder %s20, 11
      %p102 = por %p100, %p101
      %p103 = scmp.ne.s32.totalorder %s92, %s93
      %p104 = scmp.eq.s32.totalorder %s20, 0
      %p105 = por %p103, %p104
      %p106 = scmp.ne.s32.totalorder %s92, %s93
      %p107 = scmp.eq.s32.totalorder %s21, 11
      %p108 = por %p106, %p107
      %p110 = scmp.ne.s32.totalorder %s93, %s109
      %p111 = scmp.eq.s32.totalorder %s21, 0
      %p112 = por %p110, %p111
      %s114 = sadd.s32 %s113, 1
      %p117 = scmp.eq.s32.totalorder %s15, 11
      %p118 = scmp.ne.s32.totalorder %s113, %s115
      %p119 = scmp.eq.s32.totalorder %s15, 0
      %p120 = por %p118, %p119
      %p121 = scmp.ne.s32.totalorder %s113, %s115
      %p122 = scmp.eq.s32.totalorder %s20, 11
      %p123 = por %p121, %p122
      %p124 = scmp.ne.s32.totalorder %s115, %s116
      %p125 = scmp.eq.s32.totalorder %s20, 0
      %p126 = por %p124, %p125
      %p127 = scmp.ne.s32.totalorder %s115, %s116
      %p128 = scmp.eq.s32.totalorder %s21, 11
      %p129 = por %p127, %p128
      %p131 = scmp.ne.s32.totalorder %s116, %s130
      %p132 = scmp.eq.s32.totalorder %s21, 0
      %p133 = por %p131, %p132
      %s135 = sadd.s32 %s134, 1
      %p138 = scmp.eq.s32.totalorder %s15, 11
      %p139 = scmp.ne.s32.totalorder %s134, %s136
      %p140 = scmp.eq.s32.totalorder %s15, 0
      %p141 = por %p139, %p140
      %p142 = scmp.ne.s32.totalorder %s134, %s136
      %p143 = scmp.eq.s32.totalorder %s20, 11
      %p144 = por %p142, %p143
      %p145 = scmp.ne.s32.totalorder %s136, %s137
      %p146 = scmp.eq.s32.totalorder %s20, 0
      %p147 = por %p145, %p146
      %p148 = scmp.ne.s32.totalorder %s136, %s137
      %p149 = scmp.eq.s32.totalorder %s21, 11
      %p150 = por %p148, %p149
      %p152 = scmp.ne.s32.totalorder %s137, %s151
      %p153 = scmp.eq.s32.totalorder %s21, 0
      %p154 = por %p152, %p153
      %s156 = sadd.s32 %s155, 1
      %p159 = scmp.eq.s32.totalorder %s15, 11
      %p160 = scmp.ne.s32.totalorder %s155, %s157
      %p161 = scmp.eq.s32.totalorder %s15, 0
      %p162 = por %p160, %p161
      %p163 = scmp.ne.s32.totalorder %s155, %s157
      %p164 = scmp.eq.s32.totalorder %s20, 11
      %p165 = por %p163, %p164
      %p166 = scmp.ne.s32.totalorder %s157, %s158
      %p167 = scmp.eq.s32.totalorder %s20, 0
      %p168 = por %p166, %p167
      %p169 = scmp.ne.s32.totalorder %s157, %s158
      %p170 = scmp.eq.s32.totalorder %s21, 11
      %p171 = por %p169, %p170
      %p173 = scmp.ne.s32.totalorder %s158, %s172
      %p174 = scmp.eq.s32.totalorder %s21, 0
      %p175 = por %p173, %p174
      %s176 = ssub.s32 %s22, %s34
      %p177 = scmp.eq.s32.totalorder %s176, 0
      %s179 = sadd.s32 %s178, 1
      %s180 = scalar_select %p177, %s178, %s179
      %p183 = pneg %p177
      %p184 = scmp.eq.s32.totalorder %s15, 11
      %p185 = por %p183, %p184
      %p186 = scmp.ne.s32.totalorder %s178, %s181
      %p187 = scmp.eq.s32.totalorder %s15, 0
      %p188 = por %p186, %p187
      %p189 = scmp.ne.s32.totalorder %s178, %s181
      %p190 = scmp.eq.s32.totalorder %s20, 11
      %p191 = por %p189, %p190
      %p192 = scmp.ne.s32.totalorder %s181, %s182
      %p193 = scmp.eq.s32.totalorder %s20, 0
      %p194 = por %p192, %p193
      %p195 = scmp.ne.s32.totalorder %s181, %s182
      %p196 = scmp.eq.s32.totalorder %s21, 11
      %p197 = por %p195, %p196
      %p199 = scmp.ne.s32.totalorder %s182, %s198
      %p200 = scmp.eq.s32.totalorder %s21, 0
      %p201 = por %p199, %p200
      %p202 = scmp.le.s32.totalorder 1, %s15
      %p203 = scmp.lt.s32.totalorder %s15, 13
      %p204 = pnand %p202, %p203
      %p205 = pneg %p204
      // Predicated region
      $region9: #{mpnn_forward.3} parent=5 // pred_check
        _
      $region10: #{mpnn_forward.3} parent=5 // pred_check_branch
        %207 = sbr.rel (%p204) target = $region12
      $region11: #{mpnn_forward.3} parent=5 // pred_region
        %s208 = ssub.s32 %s15, 1
        // Predicated region
        $region13: #{mpnn_forward.3} parent=11 // pred_check
          %p209 = pneg %p126
        $region14: #{mpnn_forward.3} parent=11 // pred_check_branch
          %211 = sbr.rel (%p209) target = $region16
        $region15: #{mpnn_forward.3} parent=11 // pred_region
          _
        $region16: #{mpnn_forward.3} parent=11 // pred_fallthru
          _
        // Predicated region
        $region17: #{mpnn_forward.3} parent=11 // pred_check
          %p212 = pneg %p147
        $region18: #{mpnn_forward.3} parent=11 // pred_check_branch
          %214 = sbr.rel (%p212) target = $region20
        $region19: #{mpnn_forward.3} parent=11 // pred_region
          _
        $region20: #{mpnn_forward.3} parent=11 // pred_fallthru
          _
        // Predicated region
        $region21: #{mpnn_forward.3} parent=11 // pred_check
          %p215 = pneg %p168
        $region22: #{mpnn_forward.3} parent=11 // pred_check_branch
          %217 = sbr.rel (%p215) target = $region24
        $region23: #{mpnn_forward.3} parent=11 // pred_region
          _
        $region24: #{mpnn_forward.3} parent=11 // pred_fallthru
          _
      $region12: #{mpnn_forward.3} parent=5 // pred_fallthru
        _
      %p218 = scmp.lt.s32.totalorder %s15, 12
      // Predicated region
      $region25: #{mpnn_forward.3} parent=5 // pred_check
        %p219 = pneg %p218
      $region26: #{mpnn_forward.3} parent=5 // pred_check_branch
        %221 = sbr.rel (%p219) target = $region28
      $region27: #{mpnn_forward.3} parent=5 // pred_region
        // Predicated region
        $region29: #{mpnn_forward.3} parent=27 // pred_check
          %p222 = pneg %p47
        $region30: #{mpnn_forward.3} parent=27 // pred_check_branch
          %224 = sbr.rel (%p222) target = $region32
        $region31: #{mpnn_forward.3} parent=27 // pred_region
          %p225 = scmp.lt.s32.totalorder %s23, 1
          %s226 = scalar_select %p225, %s23, 1
          %s227 = scalar_lea.vmem %s0, %s226
        $region32: #{mpnn_forward.3} parent=27 // pred_fallthru
          _
        // Predicated region
        $region33: #{mpnn_forward.3} parent=27 // pred_check
          %p228 = pneg %p73
        $region34: #{mpnn_forward.3} parent=27 // pred_check_branch
          %230 = sbr.rel (%p228) target = $region36
        $region35: #{mpnn_forward.3} parent=27 // pred_region
          %s231 = smul.u32 16, %s23
          %p232 = scmp.lt.s32.totalorder %s231, 31
          %s233 = scalar_select %p232, %s231, 31
          %s234 = smul.addr %s233, 8
          %s235 = scalar_lea.vmem %s1, %s234
          %s236 = smul.u32 16, %s23
        $region36: #{mpnn_forward.3} parent=27 // pred_fallthru
          _
        // Predicated region
        $region37: #{mpnn_forward.3} parent=27 // pred_check
          %p237 = pneg %p99
        $region38: #{mpnn_forward.3} parent=27 // pred_check_branch
          %239 = sbr.rel (%p237) target = $region40
        $region39: #{mpnn_forward.3} parent=27 // pred_region
          %p240 = scmp.lt.s32.totalorder %s22, 5
          %s241 = scalar_select %p240, %s22, 5
          %s242 = smul.addr %s241, 8
          %s243 = scalar_lea.vmem %s2, %s242
        $region40: #{mpnn_forward.3} parent=27 // pred_fallthru
          _
      $region28: #{mpnn_forward.3} parent=5 // pred_fallthru
        _
      %p244 = scmp.le.s32.totalorder 1, %s15
      %p245 = scmp.lt.s32.totalorder %s15, 13
      %p246 = pnand %p244, %p245
      %p247 = pneg %p246
      // Predicated region
      $region41: #{mpnn_forward.3} parent=5 // pred_check
        _
      $region42: #{mpnn_forward.3} parent=5 // pred_check_branch
        %249 = sbr.rel (%p246) target = $region44
      $region43: #{mpnn_forward.3} parent=5 // pred_region
        %s250 = ssub.s32 %s15, 1
        %p251 = scmp.lt.s32.totalorder %s25, 1
        %s252 = scalar_select %p251, %s25, 1
        %s253 = scalar_lea.vmem %s0, %s252
        %p254 = pneg %p53
        %p255 = pneg %p50
        %s256 = smul.u32 16, %s25
        %p257 = scmp.lt.s32.totalorder %s256, 31
        %s258 = scalar_select %p257, %s256, 31
        %s259 = smul.addr %s258, 8
        %s260 = scalar_lea.vmem %s1, %s259
        %p261 = pneg %p79
        %p262 = pneg %p76
        %p263 = scmp.lt.s32.totalorder %s24, 5
        %s264 = scalar_select %p263, %s24, 5
        %s265 = smul.addr %s264, 8
        %s266 = scalar_lea.vmem %s2, %s265
        %p267 = pneg %p105
        %p268 = pneg %p102
        %p269 = pneg %p126
        %p270 = pneg %p123
        %p271 = pneg %p147
        %p272 = pneg %p144
        %p273 = pneg %p168
        %p274 = pneg %p165
        %p275 = pneg %p194
        %p276 = pneg %p191
        %s277 = sand.u32 %s181, 1
        %s278 = scalar_lea.sflag [#allocation4], %s277
        %s279 = sand.u32 %s181, 1
        %s280 = smul.addr %s279, 8
        %s281 = scalar_lea.vmem [#allocation3], %s280
        %p282 = scmp.lt.s32.totalorder %s25, 1
        %s283 = scalar_select %p282, %s25, 1
        %s284 = scalar_lea.vmem %s0, %s283
        %s285 = smul.u32 16, %s25
        %p286 = scmp.lt.s32.totalorder %s285, 31
        %s287 = scalar_select %p286, %s285, 31
        %s288 = smul.addr %s287, 8
        %s289 = scalar_lea.vmem %s1, %s288
        %s290 = smul.u32 16, %s25
        %p291 = scmp.lt.s32.totalorder %s24, 5
        %s292 = scalar_select %p291, %s24, 5
        %s293 = smul.addr %s292, 8
        %s294 = scalar_lea.vmem %s2, %s293
        %p295 = scmp.eq.s32.totalorder %s25, 0
        // Predicated region
        $region45: #{mpnn_forward.3} parent=43 // pred_check
          %p296 = pneg %p295
        $region46: #{mpnn_forward.3} parent=43 // pred_check_branch
          %298 = sbr.rel (%p296) target = $region48
        $region47: #{mpnn_forward.3} parent=43 // pred_region
          %299 = vst [vmem:[#allocation2] sm:$0xff] 0.0
        $region48: #{mpnn_forward.3} parent=43 // pred_fallthru
          _
        %v300 = vlaneseq
        %v301 = vshrl.u32 %v300, 7
        %s302 = smul.u32 %s24, 8
        %v303 = vstv %s302
        %v304 = vadd.s32 %v301, %v303
        %v305 = vld [vmem:[%s284] sm:$0x1]
        %v306 = vlaneseq
        %v307 = vshrl.u32 %v306, 7
        %v308 = vsub.s32 0, %v307
        %v309 = vrot.slane %v305, %v308
        %vm310 = vcmp.eq.s32.totalorder %v304, %v309
        %v311 = vsel %vm310, 1, 0
        %v312 = vcvt.s32.f32 %v311
        %v313 = vld [vmem:[#allocation2] sm:$0xff]
        %v314 = vld [vmem:[%s289] sm:$0xff]
        %v315 = vld [vmem:[%s289 + $0x8] sm:$0xff]
        %v316 = vld [vmem:[%s289 + $0x10] sm:$0xff]
        %v317 = vld [vmem:[%s289 + $0x18] sm:$0xff]
        %v318 = vld [vmem:[%s289 + $0x20] sm:$0xff]
        %v319 = vld [vmem:[%s289 + $0x28] sm:$0xff]
        %v320 = vld [vmem:[%s289 + $0x30] sm:$0xff]
        %v321 = vld [vmem:[%s289 + $0x38] sm:$0xff]
        %v322 = vld [vmem:[%s289 + $0x40] sm:$0xff]
        %v323 = vld [vmem:[%s289 + $0x48] sm:$0xff]
        %v324 = vld [vmem:[%s289 + $0x50] sm:$0xff]
        %v325 = vld [vmem:[%s289 + $0x58] sm:$0xff]
        %v326 = vld [vmem:[%s289 + $0x60] sm:$0xff]
        %v327 = vld [vmem:[%s289 + $0x68] sm:$0xff]
        %v328 = vld [vmem:[%s289 + $0x70] sm:$0xff]
        %v329 = vld [vmem:[%s289 + $0x78] sm:$0xff]
        %330 = vmatprep.subr.mxu0 0.0
        %331 = vmatpush1.msra.mxu0 %v329
        %332 = vmatprep.subr.mxu0 0.0
        %333 = vmatpush1.msra.mxu0 %v328
        %334 = vmatprep.subr.mxu0 0.0
        %335 = vmatpush1.msra.mxu0 %v327
        %336 = vmatprep.subr.mxu0 0.0
        %337 = vmatpush1.msra.mxu0 %v326
        %338 = vmatprep.subr.mxu0 0.0
        %339 = vmatpush1.msra.mxu0 %v325
        %340 = vmatprep.subr.mxu0 0.0
        %341 = vmatpush1.msra.mxu0 %v324
        %342 = vmatprep.subr.mxu0 0.0
        %343 = vmatpush1.msra.mxu0 %v323
        %344 = vmatprep.subr.mxu0 0.0
        %345 = vmatpush1.msra.mxu0 %v322
        %346 = vmatprep.subr.mxu0 0.0
        %347 = vmatpush1.msra.mxu0 %v321
        %348 = vmatprep.subr.mxu0 0.0
        %349 = vmatpush1.msra.mxu0 %v320
        %350 = vmatprep.subr.mxu0 0.0
        %351 = vmatpush1.msra.mxu0 %v319
        %352 = vmatprep.subr.mxu0 0.0
        %353 = vmatpush1.msra.mxu0 %v318
        %354 = vmatprep.subr.mxu0 0.0
        %355 = vmatpush1.msra.mxu0 %v317
        %356 = vmatprep.subr.mxu0 0.0
        %357 = vmatpush1.msra.mxu0 %v316
        %358 = vmatprep.subr.mxu0 0.0
        %359 = vmatpush1.msra.mxu0 %v315
        %360 = vmatprep.subr.mxu0 0.0
        %361 = vmatpush1.msra.mxu0 %v314
        %362 = vmatprep.subr.mxu0 0.0
        %363 = vmatpush2.msra.mxu0 0.0
        %364 = vmatprep.subr.mxu0 0.0
        %365 = vmatpush2.msra.mxu0 0.0
        %366 = vmatprep.subr.mxu0 0.0
        %367 = vmatpush2.msra.mxu0 0.0
        %368 = vmatprep.subr.mxu0 0.0
        %369 = vmatpush2.msra.mxu0 0.0
        %370 = vmatprep.subr.mxu0 0.0
        %371 = vmatpush2.msra.mxu0 0.0
        %372 = vmatprep.subr.mxu0 0.0
        %373 = vmatpush2.msra.mxu0 0.0
        %374 = vmatprep.subr.mxu0 0.0
        %375 = vmatpush2.msra.mxu0 0.0
        %376 = vmatprep.subr.mxu0 0.0
        %377 = vmatpush2.msra.mxu0 0.0
        %378 = vmatprep.subr.mxu0 0.0
        %379 = vmatpush2.msra.mxu0 0.0
        %380 = vmatprep.subr.mxu0 0.0
        %381 = vmatpush2.msra.mxu0 0.0
        %382 = vmatprep.subr.mxu0 0.0
        %383 = vmatpush2.msra.mxu0 0.0
        %384 = vmatprep.subr.mxu0 0.0
        %385 = vmatpush2.msra.mxu0 0.0
        %386 = vmatprep.subr.mxu0 0.0
        %387 = vmatpush2.msra.mxu0 0.0
        %388 = vmatprep.subr.mxu0 0.0
        %389 = vmatpush2.msra.mxu0 0.0
        %390 = vmatprep.subr.mxu0 0.0
        %391 = vmatpush2.msra.mxu0 0.0
        %392 = vmatprep.subr.mxu0 0.0
        %393 = vmatpush2.msra.mxu0 0.0
        %394 = vmatprep.mubr.f32.mxu0 0.0
        %395 = vmatmul.mubr.f32.gmra.mxu0 %v312
        %v396 = vpop.f32.mrf.mxu0
        %v397 = vadd.f32 0.0, %v396
        %v398 = vpop.f32.mrf.mxu0
        %399 = vdwg.mxu0
        %v400 = vadd.f32 %v313, %v397
        %401 = vst [vmem:[#allocation2] sm:$0xff] %v400
        %p402 = scmp.eq.s32.totalorder %s25, 1
        // Predicated region
        $region49: #{mpnn_forward.3} parent=43 // pred_check
          %p403 = pneg %p402
        $region50: #{mpnn_forward.3} parent=43 // pred_check_branch
          %405 = sbr.rel (%p403) target = $region52
        $region51: #{mpnn_forward.3} parent=43 // pred_region
          %v406 = vld [vmem:[#allocation2] sm:$0xff]
          %v407 = vld [vmem:[%s3] sm:$0xff]
          %v408 = vld [vmem:[%s3 + $0x8] sm:$0xff]
          %v409 = vld [vmem:[%s3 + $0x10] sm:$0xff]
          %v410 = vld [vmem:[%s3 + $0x18] sm:$0xff]
          %v411 = vld [vmem:[%s3 + $0x20] sm:$0xff]
          %v412 = vld [vmem:[%s3 + $0x28] sm:$0xff]
          %v413 = vld [vmem:[%s3 + $0x30] sm:$0xff]
          %v414 = vld [vmem:[%s3 + $0x38] sm:$0xff]
          %v415 = vld [vmem:[%s3 + $0x40] sm:$0xff]
          %v416 = vld [vmem:[%s3 + $0x48] sm:$0xff]
          %v417 = vld [vmem:[%s3 + $0x50] sm:$0xff]
          %v418 = vld [vmem:[%s3 + $0x58] sm:$0xff]
          %v419 = vld [vmem:[%s3 + $0x60] sm:$0xff]
          %v420 = vld [vmem:[%s3 + $0x68] sm:$0xff]
          %v421 = vld [vmem:[%s3 + $0x70] sm:$0xff]
          %v422 = vld [vmem:[%s3 + $0x78] sm:$0xff]
          %v423 = vld [vmem:[%s294] sm:$0xff]
          %v424 = vld [vmem:[%s4] sm:$0xff]
          %v425 = vld [vmem:[%s4 + $0x8] sm:$0xff]
          %v426 = vld [vmem:[%s4 + $0x10] sm:$0xff]
          %v427 = vld [vmem:[%s4 + $0x18] sm:$0xff]
          %v428 = vld [vmem:[%s4 + $0x20] sm:$0xff]
          %v429 = vld [vmem:[%s4 + $0x28] sm:$0xff]
          %v430 = vld [vmem:[%s4 + $0x30] sm:$0xff]
          %v431 = vld [vmem:[%s4 + $0x38] sm:$0xff]
          %vm432 = vcmask 523264
          %v434 = vsel %vm432, %v423, 0
          %436 = vmatprep.subr.mxu0 0.0
          %437 = vmatpush1.msra.mxu0 0.0
          %438 = vmatprep.subr.mxu0 0.0
          %439 = vmatpush1.msra.mxu0 0.0
          %440 = vmatprep.subr.mxu0 0.0
          %441 = vmatpush1.msra.mxu0 0.0
          %442 = vmatprep.subr.mxu0 0.0
          %443 = vmatpush1.msra.mxu0 0.0
          %444 = vmatprep.subr.mxu0 0.0
          %445 = vmatpush1.msra.mxu0 0.0
          %446 = vmatprep.subr.mxu0 0.0
          %447 = vmatpush1.msra.mxu0 0.0
          %448 = vmatprep.subr.mxu0 0.0
          %449 = vmatpush1.msra.mxu0 0.0
          %450 = vmatprep.subr.mxu0 0.0
          %451 = vmatpush1.msra.mxu0 0.0
          %452 = vmatprep.subr.mxu0 0.0
          %453 = vmatpush1.msra.mxu0 %v431
          %454 = vmatprep.subr.mxu0 0.0
          %455 = vmatpush1.msra.mxu0 %v430
          %456 = vmatprep.subr.mxu0 0.0
          %457 = vmatpush1.msra.mxu0 %v429
          %458 = vmatprep.subr.mxu0 0.0
          %459 = vmatpush1.msra.mxu0 %v428
          %460 = vmatprep.subr.mxu0 0.0
          %461 = vmatpush1.msra.mxu0 %v427
          %462 = vmatprep.subr.mxu0 0.0
          %463 = vmatpush1.msra.mxu0 %v426
          %464 = vmatprep.subr.mxu0 0.0
          %465 = vmatpush1.msra.mxu0 %v425
          %466 = vmatprep.subr.mxu0 0.0
          %467 = vmatpush1.msra.mxu0 %v424
          %468 = vmatprep.subr.mxu0 0.0
          %469 = vmatpush2.msra.mxu0 0.0
          %470 = vmatprep.subr.mxu0 0.0
          %471 = vmatpush2.msra.mxu0 0.0
          %472 = vmatprep.subr.mxu0 0.0
          %473 = vmatpush2.msra.mxu0 0.0
          %474 = vmatprep.subr.mxu0 0.0
          %475 = vmatpush2.msra.mxu0 0.0
          %476 = vmatprep.subr.mxu0 0.0
          %477 = vmatpush2.msra.mxu0 0.0
          %478 = vmatprep.subr.mxu0 0.0
          %479 = vmatpush2.msra.mxu0 0.0
          %480 = vmatprep.subr.mxu0 0.0
          %481 = vmatpush2.msra.mxu0 0.0
          %482 = vmatprep.subr.mxu0 0.0
          %483 = vmatpush2.msra.mxu0 0.0
          %484 = vmatprep.subr.mxu0 0.0
          %485 = vmatpush2.msra.mxu0 0.0
          %486 = vmatprep.subr.mxu0 0.0
          %487 = vmatpush2.msra.mxu0 0.0
          %488 = vmatprep.subr.mxu0 0.0
          %489 = vmatpush2.msra.mxu0 0.0
          %490 = vmatprep.subr.mxu0 0.0
          %491 = vmatpush2.msra.mxu0 0.0
          %492 = vmatprep.subr.mxu0 0.0
          %493 = vmatpush2.msra.mxu0 0.0
          %494 = vmatprep.subr.mxu0 0.0
          %495 = vmatpush2.msra.mxu0 0.0
          %496 = vmatprep.subr.mxu0 0.0
          %497 = vmatpush2.msra.mxu0 0.0
          %498 = vmatprep.subr.mxu0 0.0
          %499 = vmatpush2.msra.mxu0 0.0
          %500 = vmatprep.mubr.f32.mxu0 0.0
          %501 = vmatmul.mubr.f32.gmra.mxu0 %v434
          %v502 = vpop.f32.mrf.mxu0
          %v503 = vadd.f32 0.0, %v502
          %v504 = vpop.f32.mrf.mxu0
          %505 = vdwg.mxu0
          %506 = vmatprep.subr.mxu0 0.0
          %507 = vmatpush1.msra.mxu0 %v422
          %508 = vmatprep.subr.mxu0 0.0
          %509 = vmatpush1.msra.mxu0 %v421
          %510 = vmatprep.subr.mxu0 0.0
          %511 = vmatpush1.msra.mxu0 %v420
          %512 = vmatprep.subr.mxu0 0.0
          %513 = vmatpush1.msra.mxu0 %v419
          %514 = vmatprep.subr.mxu0 0.0
          %515 = vmatpush1.msra.mxu0 %v418
          %516 = vmatprep.subr.mxu0 0.0
          %517 = vmatpush1.msra.mxu0 %v417
          %518 = vmatprep.subr.mxu0 0.0
          %519 = vmatpush1.msra.mxu0 %v416
          %520 = vmatprep.subr.mxu0 0.0
          %521 = vmatpush1.msra.mxu0 %v415
          %522 = vmatprep.subr.mxu0 0.0
          %523 = vmatpush1.msra.mxu0 %v414
          %524 = vmatprep.subr.mxu0 0.0
          %525 = vmatpush1.msra.mxu0 %v413
          %526 = vmatprep.subr.mxu0 0.0
          %527 = vmatpush1.msra.mxu0 %v412
          %528 = vmatprep.subr.mxu0 0.0
          %529 = vmatpush1.msra.mxu0 %v411
          %530 = vmatprep.subr.mxu0 0.0
          %531 = vmatpush1.msra.mxu0 %v410
          %532 = vmatprep.subr.mxu0 0.0
          %533 = vmatpush1.msra.mxu0 %v409
          %534 = vmatprep.subr.mxu0 0.0
          %535 = vmatpush1.msra.mxu0 %v408
          %536 = vmatprep.subr.mxu0 0.0
          %537 = vmatpush1.msra.mxu0 %v407
          %538 = vmatprep.subr.mxu0 0.0
          %539 = vmatpush2.msra.mxu0 0.0
          %540 = vmatprep.subr.mxu0 0.0
          %541 = vmatpush2.msra.mxu0 0.0
          %542 = vmatprep.subr.mxu0 0.0
          %543 = vmatpush2.msra.mxu0 0.0
          %544 = vmatprep.subr.mxu0 0.0
          %545 = vmatpush2.msra.mxu0 0.0
          %546 = vmatprep.subr.mxu0 0.0
          %547 = vmatpush2.msra.mxu0 0.0
          %548 = vmatprep.subr.mxu0 0.0
          %549 = vmatpush2.msra.mxu0 0.0
          %550 = vmatprep.subr.mxu0 0.0
          %551 = vmatpush2.msra.mxu0 0.0
          %552 = vmatprep.subr.mxu0 0.0
          %553 = vmatpush2.msra.mxu0 0.0
          %554 = vmatprep.subr.mxu0 0.0
          %555 = vmatpush2.msra.mxu0 0.0
          %556 = vmatprep.subr.mxu0 0.0
          %557 = vmatpush2.msra.mxu0 0.0
          %558 = vmatprep.subr.mxu0 0.0
          %559 = vmatpush2.msra.mxu0 0.0
          %560 = vmatprep.subr.mxu0 0.0
          %561 = vmatpush2.msra.mxu0 0.0
          %562 = vmatprep.subr.mxu0 0.0
          %563 = vmatpush2.msra.mxu0 0.0
          %564 = vmatprep.subr.mxu0 0.0
          %565 = vmatpush2.msra.mxu0 0.0
          %566 = vmatprep.subr.mxu0 0.0
          %567 = vmatpush2.msra.mxu0 0.0
          %568 = vmatprep.subr.mxu0 0.0
          %569 = vmatpush2.msra.mxu0 0.0
          %570 = vmatprep.mubr.f32.mxu0 0.0
          %571 = vmatmul.mubr.f32.gmra.mxu0 %v406
          %v572 = vpop.f32.mrf.mxu0
          %v573 = vadd.f32 %v503, %v572
          %v574 = vpop.f32.mrf.mxu0
          %575 = vdwg.mxu0
          %v576 = vld [vmem:[%s5] sm:$0x1]
          %v578 = vlaneseq
          %v579 = vshrl.u32 %v578, 7
          %v580 = vsub.s32 0, %v579
          %v581 = vrot.slane %v576, %v580
          %v583 = vadd.f32 %v573, %v581
          %584 = vst [vmem:[%s281] sm:$0xff] %v583
        $region52: #{mpnn_forward.3} parent=43 // pred_fallthru
          _
        %s585 = sand.u32 %s181, 1
        %s586 = scalar_lea.sflag [#allocation4], %s585
        %s587 = sand.u32 %s181, 1
        %s588 = smul.addr %s587, 8
        %s589 = scalar_lea.vmem [#allocation3], %s588
        // Predicated region
        $region53: #{mpnn_forward.3} parent=43 // pred_check
          %p590 = pneg %p191
        $region54: #{mpnn_forward.3} parent=43 // pred_check_branch
          %592 = sbr.rel (%p590) target = $region56
        $region55: #{mpnn_forward.3} parent=43 // pred_region
          %s594 = ssub.s32 128, 128
          %595 = vsyncadd %s586, %s594
          %s596 = smul.addr %s24, 128
          %s597 = scalar_lea.hbm %s6, %s596
          %s599 = sshll.u32 %s589, 4
          %s600 = int_to_ptr.vmem [resolvable:$true] %s599
          %602 = dma.vmem_to_hbm [thread:$0]  %s600, 128, %s597, %s586
        $region56: #{mpnn_forward.3} parent=43 // pred_fallthru
          _
      $region44: #{mpnn_forward.3} parent=5 // pred_fallthru
        _
      %p603 = scmp.le.s32.totalorder 2, %s15
      // Predicated region
      $region57: #{mpnn_forward.3} parent=5 // pred_check
        %p604 = pneg %p603
      $region58: #{mpnn_forward.3} parent=5 // pred_check_branch
        %606 = sbr.rel (%p604) target = $region60
      $region59: #{mpnn_forward.3} parent=5 // pred_region
        %s607 = ssub.s32 %s15, 2
        // Predicated region
        $region61: #{mpnn_forward.3} parent=59 // pred_check
          %p608 = pneg %p197
        $region62: #{mpnn_forward.3} parent=59 // pred_check_branch
          %610 = sbr.rel (%p608) target = $region64
        $region63: #{mpnn_forward.3} parent=59 // pred_region
          %s611 = sand.u32 %s182, 1
          %s612 = scalar_lea.sflag [#allocation4], %s611
          %s613 = sand.u32 %s182, 1
          %s614 = smul.addr %s613, 8
          %s615 = scalar_lea.vmem [#allocation3], %s614
          %616 = dma.done %s612, 128
        $region64: #{mpnn_forward.3} parent=59 // pred_fallthru
          _
      $region60: #{mpnn_forward.3} parent=5 // pred_fallthru
        _
    $region6: #{mpnn_forward.3} parent=1 // loop_footer
      %s19 = sadd.s32 1, %s15
    $region7: #{mpnn_forward.3} parent=1 // loop_footer_branch
      %14 = sbr.rel target = $region3
    $region8: #{mpnn_forward.3} parent=1 // loop_exit
      _
    %617 = vsyncpa [#allocation4], 1
    %s618 = scalar_lea.sflag [#allocation4], 1
    %619 = vsyncpa %s618, 1

// kernel: mpnn_forward.2
$region0: #{mpnn_forward.2}
  #allocation0 [shape = 'u32[]', space=smem, size = 0x4, offset = 0x4, fixed_abs, tag = 'smem constant byte address 0x4 - core index']
  #allocation1 [shape = 'u32[144,128]{1,0:T(1,128)}', space=vmem, size = 0x12000, scoped, tag = 'internal scratch']
  %s0 = inlined_call_operand.vmem [shape: f32[256,64], index: 0, kind: input, shape index: {}]
  %s1 = inlined_call_operand.vmem [shape: f32[256,64], index: 1, kind: input, shape index: {}]
  %s2 = inlined_call_operand.vmem [shape: f32[256,32], index: 2, kind: input, shape index: {}]
  %s3 = inlined_call_operand.vmem [shape: f32[64,256], index: 3, kind: input, shape index: {}]
  %s4 = inlined_call_operand.vmem [shape: f32[64,256], index: 4, kind: input, shape index: {}]
  %s5 = inlined_call_operand.vmem [shape: f32[32,256], index: 5, kind: input, shape index: {}]
  %s6 = inlined_call_operand.vmem [shape: f32[1,256], index: 6, kind: input, shape index: {}]
  %s7 = inlined_call_operand.hbm [shape: f32[256,128], index: 7, kind: output, shape index: {0}]
  %s8 = inlined_call_operand.vmem [shape: f32[256,128], index: 8, kind: output, shape index: {1}]
  %9 = xla_tuple %s7, %s8
  %s10 = sld [smem:[#allocation0]]
  $region69: #{mpnn_forward.2} parent=0
    _
  %s12 = ssub.s32 1, %s10
  %s13 = scalar_select 0, %s12, %s10
  $region1: #{mpnn_forward.2} parent=0
    #allocation2 [shape = 'u8[131072]{0}', space=vmem, size = 0x20000, scoped, tag = 'output window, operand 0']
    #allocation3 [shape = 's32[2]{0}', space=sflag, size = 0x8, scoped, tag = 'scoped memory for mpnn_forward.2']
    %14 = vsyncpa [#allocation3], 0
    %s15 = scalar_lea.sflag [#allocation3], 1
    %16 = vsyncpa %s15, 0
    loop: start=0, step=1, limit=4
    $region2: #{mpnn_forward.2} parent=1 // loop_pre_header
      _
    $region3: #{mpnn_forward.2} parent=1 // loop_header
      %s18 = sphi 0, %s22
      %p19 = scmp.ge.s32.totalorder %s18, 4
      %s28 = sphi 0, %s30
      %s31 = sphi 0, %s28
      %s32 = sphi 0, %s31
      %s48 = sphi 0, %s32
      %s54 = sphi 0, %s56
      %s57 = sphi 0, %s54
      %s58 = sphi 0, %s57
      %s74 = sphi 0, %s58
      %s80 = sphi 0, %s82
      %s83 = sphi 0, %s80
      %s84 = sphi 0, %s83
      %s100 = sphi 0, %s84
      %s104 = sphi 0, %s104
      %s106 = sphi 0, %s104
      %s107 = sphi 0, %s106
      %s121 = sphi 0, %s107
      %s125 = sphi 0, %s125
      %s127 = sphi 0, %s125
      %s128 = sphi 0, %s127
      %s142 = sphi 0, %s128
      %s146 = sphi 0, %s146
      %s148 = sphi 0, %s146
      %s149 = sphi 0, %s148
      %s163 = sphi 0, %s149
      %s167 = sphi 0, %s167
      %s169 = sphi 0, %s167
      %s170 = sphi 0, %s169
      %s184 = sphi 0, %s170
      %s190 = sphi 0, %s192
      %s193 = sphi 0, %s190
      %s194 = sphi 0, %s193
      %s210 = sphi 0, %s194
      %s216 = sphi 0, %s218
      %s219 = sphi 0, %s216
      %s220 = sphi 0, %s219
      %s236 = sphi 0, %s220
    $region4: #{mpnn_forward.2} parent=1 // loop_header_branch
      %21 = sbr.rel (%p19) target = $region8
    $region5: #{mpnn_forward.2} parent=1 // loop_body
      %s23 = ssub.s32 %s18, 1
      %s24 = ssub.s32 %s18, 2
      %s25 = sadd.s32 %s18, 1
      %s26 = ssub.s32 %s18, %s25
      %p27 = scmp.eq.s32.totalorder %s26, 0
      %s29 = sadd.s32 %s28, 1
      %s30 = scalar_select %p27, %s28, %s29
      %p33 = pneg %p27
      %p34 = scmp.eq.s32.totalorder %s18, 1
      %p35 = por %p33, %p34
      %p36 = scmp.ne.s32.totalorder %s28, %s31
      %p37 = scmp.eq.s32.totalorder %s18, 0
      %p38 = por %p36, %p37
      %p39 = scmp.ne.s32.totalorder %s28, %s31
      %p40 = scmp.eq.s32.totalorder %s23, 1
      %p41 = por %p39, %p40
      %p42 = scmp.ne.s32.totalorder %s31, %s32
      %p43 = scmp.eq.s32.totalorder %s23, 0
      %p44 = por %p42, %p43
      %p45 = scmp.ne.s32.totalorder %s31, %s32
      %p46 = scmp.eq.s32.totalorder %s24, 1
      %p47 = por %p45, %p46
      %p49 = scmp.ne.s32.totalorder %s32, %s48
      %p50 = scmp.eq.s32.totalorder %s24, 0
      %p51 = por %p49, %p50
      %s52 = ssub.s32 %s18, %s25
      %p53 = scmp.eq.s32.totalorder %s52, 0
      %s55 = sadd.s32 %s54, 1
      %s56 = scalar_select %p53, %s54, %s55
      %p59 = pneg %p53
      %p60 = scmp.eq.s32.totalorder %s18, 1
      %p61 = por %p59, %p60
      %p62 = scmp.ne.s32.totalorder %s54, %s57
      %p63 = scmp.eq.s32.totalorder %s18, 0
      %p64 = por %p62, %p63
      %p65 = scmp.ne.s32.totalorder %s54, %s57
      %p66 = scmp.eq.s32.totalorder %s23, 1
      %p67 = por %p65, %p66
      %p68 = scmp.ne.s32.totalorder %s57, %s58
      %p69 = scmp.eq.s32.totalorder %s23, 0
      %p70 = por %p68, %p69
      %p71 = scmp.ne.s32.totalorder %s57, %s58
      %p72 = scmp.eq.s32.totalorder %s24, 1
      %p73 = por %p71, %p72
      %p75 = scmp.ne.s32.totalorder %s58, %s74
      %p76 = scmp.eq.s32.totalorder %s24, 0
      %p77 = por %p75, %p76
      %s78 = ssub.s32 %s18, %s25
      %p79 = scmp.eq.s32.totalorder %s78, 0
      %s81 = sadd.s32 %s80, 1
      %s82 = scalar_select %p79, %s80, %s81
      %p85 = pneg %p79
      %p86 = scmp.eq.s32.totalorder %s18, 1
      %p87 = por %p85, %p86
      %p88 = scmp.ne.s32.totalorder %s80, %s83
      %p89 = scmp.eq.s32.totalorder %s18, 0
      %p90 = por %p88, %p89
      %p91 = scmp.ne.s32.totalorder %s80, %s83
      %p92 = scmp.eq.s32.totalorder %s23, 1
      %p93 = por %p91, %p92
      %p94 = scmp.ne.s32.totalorder %s83, %s84
      %p95 = scmp.eq.s32.totalorder %s23, 0
      %p96 = por %p94, %p95
      %p97 = scmp.ne.s32.totalorder %s83, %s84
      %p98 = scmp.eq.s32.totalorder %s24, 1
      %p99 = por %p97, %p98
      %p101 = scmp.ne.s32.totalorder %s84, %s100
      %p102 = scmp.eq.s32.totalorder %s24, 0
      %p103 = por %p101, %p102
      %s105 = sadd.s32 %s104, 1
      %p108 = scmp.eq.s32.totalorder %s18, 1
      %p109 = scmp.ne.s32.totalorder %s104, %s106
      %p110 = scmp.eq.s32.totalorder %s18, 0
      %p111 = por %p109, %p110
      %p112 = scmp.ne.s32.totalorder %s104, %s106
      %p113 = scmp.eq.s32.totalorder %s23, 1
      %p114 = por %p112, %p113
      %p115 = scmp.ne.s32.totalorder %s106, %s107
      %p116 = scmp.eq.s32.totalorder %s23, 0
      %p117 = por %p115, %p116
      %p118 = scmp.ne.s32.totalorder %s106, %s107
      %p119 = scmp.eq.s32.totalorder %s24, 1
      %p120 = por %p118, %p119
      %p122 = scmp.ne.s32.totalorder %s107, %s121
      %p123 = scmp.eq.s32.totalorder %s24, 0
      %p124 = por %p122, %p123
      %s126 = sadd.s32 %s125, 1
      %p129 = scmp.eq.s32.totalorder %s18, 1
      %p130 = scmp.ne.s32.totalorder %s125, %s127
      %p131 = scmp.eq.s32.totalorder %s18, 0
      %p132 = por %p130, %p131
      %p133 = scmp.ne.s32.totalorder %s125, %s127
      %p134 = scmp.eq.s32.totalorder %s23, 1
      %p135 = por %p133, %p134
      %p136 = scmp.ne.s32.totalorder %s127, %s128
      %p137 = scmp.eq.s32.totalorder %s23, 0
      %p138 = por %p136, %p137
      %p139 = scmp.ne.s32.totalorder %s127, %s128
      %p140 = scmp.eq.s32.totalorder %s24, 1
      %p141 = por %p139, %p140
      %p143 = scmp.ne.s32.totalorder %s128, %s142
      %p144 = scmp.eq.s32.totalorder %s24, 0
      %p145 = por %p143, %p144
      %s147 = sadd.s32 %s146, 1
      %p150 = scmp.eq.s32.totalorder %s18, 1
      %p151 = scmp.ne.s32.totalorder %s146, %s148
      %p152 = scmp.eq.s32.totalorder %s18, 0
      %p153 = por %p151, %p152
      %p154 = scmp.ne.s32.totalorder %s146, %s148
      %p155 = scmp.eq.s32.totalorder %s23, 1
      %p156 = por %p154, %p155
      %p157 = scmp.ne.s32.totalorder %s148, %s149
      %p158 = scmp.eq.s32.totalorder %s23, 0
      %p159 = por %p157, %p158
      %p160 = scmp.ne.s32.totalorder %s148, %s149
      %p161 = scmp.eq.s32.totalorder %s24, 1
      %p162 = por %p160, %p161
      %p164 = scmp.ne.s32.totalorder %s149, %s163
      %p165 = scmp.eq.s32.totalorder %s24, 0
      %p166 = por %p164, %p165
      %s168 = sadd.s32 %s167, 1
      %p171 = scmp.eq.s32.totalorder %s18, 1
      %p172 = scmp.ne.s32.totalorder %s167, %s169
      %p173 = scmp.eq.s32.totalorder %s18, 0
      %p174 = por %p172, %p173
      %p175 = scmp.ne.s32.totalorder %s167, %s169
      %p176 = scmp.eq.s32.totalorder %s23, 1
      %p177 = por %p175, %p176
      %p178 = scmp.ne.s32.totalorder %s169, %s170
      %p179 = scmp.eq.s32.totalorder %s23, 0
      %p180 = por %p178, %p179
      %p181 = scmp.ne.s32.totalorder %s169, %s170
      %p182 = scmp.eq.s32.totalorder %s24, 1
      %p183 = por %p181, %p182
      %p185 = scmp.ne.s32.totalorder %s170, %s184
      %p186 = scmp.eq.s32.totalorder %s24, 0
      %p187 = por %p185, %p186
      %s188 = ssub.s32 %s18, %s25
      %p189 = scmp.eq.s32.totalorder %s188, 0
      %s191 = sadd.s32 %s190, 1
      %s192 = scalar_select %p189, %s190, %s191
      %p195 = pneg %p189
      %p196 = scmp.eq.s32.totalorder %s18, 1
      %p197 = por %p195, %p196
      %p198 = scmp.ne.s32.totalorder %s190, %s193
      %p199 = scmp.eq.s32.totalorder %s18, 0
      %p200 = por %p198, %p199
      %p201 = scmp.ne.s32.totalorder %s190, %s193
      %p202 = scmp.eq.s32.totalorder %s23, 1
      %p203 = por %p201, %p202
      %p204 = scmp.ne.s32.totalorder %s193, %s194
      %p205 = scmp.eq.s32.totalorder %s23, 0
      %p206 = por %p204, %p205
      %p207 = scmp.ne.s32.totalorder %s193, %s194
      %p208 = scmp.eq.s32.totalorder %s24, 1
      %p209 = por %p207, %p208
      %p211 = scmp.ne.s32.totalorder %s194, %s210
      %p212 = scmp.eq.s32.totalorder %s24, 0
      %p213 = por %p211, %p212
      %s214 = ssub.s32 %s18, %s25
      %p215 = scmp.eq.s32.totalorder %s214, 0
      %s217 = sadd.s32 %s216, 1
      %s218 = scalar_select %p215, %s216, %s217
      %p221 = pneg %p215
      %p222 = scmp.eq.s32.totalorder %s18, 1
      %p223 = por %p221, %p222
      %p224 = scmp.ne.s32.totalorder %s216, %s219
      %p225 = scmp.eq.s32.totalorder %s18, 0
      %p226 = por %p224, %p225
      %p227 = scmp.ne.s32.totalorder %s216, %s219
      %p228 = scmp.eq.s32.totalorder %s23, 1
      %p229 = por %p227, %p228
      %p230 = scmp.ne.s32.totalorder %s219, %s220
      %p231 = scmp.eq.s32.totalorder %s23, 0
      %p232 = por %p230, %p231
      %p233 = scmp.ne.s32.totalorder %s219, %s220
      %p234 = scmp.eq.s32.totalorder %s24, 1
      %p235 = por %p233, %p234
      %p237 = scmp.ne.s32.totalorder %s220, %s236
      %p238 = scmp.eq.s32.totalorder %s24, 0
      %p239 = por %p237, %p238
      %p240 = scmp.le.s32.totalorder 1, %s18
      %p241 = scmp.lt.s32.totalorder %s18, 3
      %p242 = pnand %p240, %p241
      %p243 = pneg %p242
      // Predicated region
      $region9: #{mpnn_forward.2} parent=5 // pred_check
        _
      $region10: #{mpnn_forward.2} parent=5 // pred_check_branch
        %245 = sbr.rel (%p242) target = $region12
      $region11: #{mpnn_forward.2} parent=5 // pred_region
        %s246 = ssub.s32 %s18, 1
        // Predicated region
        $region13: #{mpnn_forward.2} parent=11 // pred_check
          %p247 = pneg %p117
        $region14: #{mpnn_forward.2} parent=11 // pred_check_branch
          %249 = sbr.rel (%p247) target = $region16
        $region15: #{mpnn_forward.2} parent=11 // pred_region
          _
        $region16: #{mpnn_forward.2} parent=11 // pred_fallthru
          _
        // Predicated region
        $region17: #{mpnn_forward.2} parent=11 // pred_check
          %p250 = pneg %p138
        $region18: #{mpnn_forward.2} parent=11 // pred_check_branch
          %252 = sbr.rel (%p250) target = $region20
        $region19: #{mpnn_forward.2} parent=11 // pred_region
          _
        $region20: #{mpnn_forward.2} parent=11 // pred_fallthru
          _
        // Predicated region
        $region21: #{mpnn_forward.2} parent=11 // pred_check
          %p253 = pneg %p159
        $region22: #{mpnn_forward.2} parent=11 // pred_check_branch
          %255 = sbr.rel (%p253) target = $region24
        $region23: #{mpnn_forward.2} parent=11 // pred_region
          _
        $region24: #{mpnn_forward.2} parent=11 // pred_fallthru
          _
        // Predicated region
        $region25: #{mpnn_forward.2} parent=11 // pred_check
          %p256 = pneg %p180
        $region26: #{mpnn_forward.2} parent=11 // pred_check_branch
          %258 = sbr.rel (%p256) target = $region28
        $region27: #{mpnn_forward.2} parent=11 // pred_region
          _
        $region28: #{mpnn_forward.2} parent=11 // pred_fallthru
          _
      $region12: #{mpnn_forward.2} parent=5 // pred_fallthru
        _
      %p259 = scmp.lt.s32.totalorder %s18, 2
      // Predicated region
      $region29: #{mpnn_forward.2} parent=5 // pred_check
        %p260 = pneg %p259
      $region30: #{mpnn_forward.2} parent=5 // pred_check_branch
        %262 = sbr.rel (%p260) target = $region32
      $region31: #{mpnn_forward.2} parent=5 // pred_region
        // Predicated region
        $region33: #{mpnn_forward.2} parent=31 // pred_check
          %p263 = pneg %p38
        $region34: #{mpnn_forward.2} parent=31 // pred_check_branch
          %265 = sbr.rel (%p263) target = $region36
        $region35: #{mpnn_forward.2} parent=31 // pred_region
          %s266 = smul.u32 16, %s18
          %p267 = scmp.lt.s32.totalorder %s266, 31
          %s268 = scalar_select %p267, %s266, 31
          %s269 = smul.addr %s268, 8
          %s270 = scalar_lea.vmem %s0, %s269
          %s271 = smul.u32 16, %s18
        $region36: #{mpnn_forward.2} parent=31 // pred_fallthru
          _
        // Predicated region
        $region37: #{mpnn_forward.2} parent=31 // pred_check
          %p272 = pneg %p64
        $region38: #{mpnn_forward.2} parent=31 // pred_check_branch
          %274 = sbr.rel (%p272) target = $region40
        $region39: #{mpnn_forward.2} parent=31 // pred_region
          %s275 = smul.u32 16, %s18
          %p276 = scmp.lt.s32.totalorder %s275, 31
          %s277 = scalar_select %p276, %s275, 31
          %s278 = smul.addr %s277, 8
          %s279 = scalar_lea.vmem %s1, %s278
          %s280 = smul.u32 16, %s18
        $region40: #{mpnn_forward.2} parent=31 // pred_fallthru
          _
        // Predicated region
        $region41: #{mpnn_forward.2} parent=31 // pred_check
          %p281 = pneg %p90
        $region42: #{mpnn_forward.2} parent=31 // pred_check_branch
          %283 = sbr.rel (%p281) target = $region44
        $region43: #{mpnn_forward.2} parent=31 // pred_region
          %s284 = smul.u32 16, %s18
          %p285 = scmp.lt.s32.totalorder %s284, 31
          %s286 = scalar_select %p285, %s284, 31
          %s287 = smul.addr %s286, 8
          %s288 = scalar_lea.vmem %s2, %s287
          %s289 = smul.u32 16, %s18
        $region44: #{mpnn_forward.2} parent=31 // pred_fallthru
          _
      $region32: #{mpnn_forward.2} parent=5 // pred_fallthru
        _
      %p290 = scmp.le.s32.totalorder 1, %s18
      %p291 = scmp.lt.s32.totalorder %s18, 3
      %p292 = pnand %p290, %p291
      %p293 = pneg %p292
      // Predicated region
      $region45: #{mpnn_forward.2} parent=5 // pred_check
        _
      $region46: #{mpnn_forward.2} parent=5 // pred_check_branch
        %295 = sbr.rel (%p292) target = $region48
      $region47: #{mpnn_forward.2} parent=5 // pred_region
        %s296 = ssub.s32 %s18, 1
        %s297 = smul.u32 16, %s23
        %p298 = scmp.lt.s32.totalorder %s297, 31
        %s299 = scalar_select %p298, %s297, 31
        %s300 = smul.addr %s299, 8
        %s301 = scalar_lea.vmem %s0, %s300
        %p302 = pneg %p44
        %p303 = pneg %p41
        %s304 = smul.u32 16, %s23
        %p305 = scmp.lt.s32.totalorder %s304, 31
        %s306 = scalar_select %p305, %s304, 31
        %s307 = smul.addr %s306, 8
        %s308 = scalar_lea.vmem %s1, %s307
        %p309 = pneg %p70
        %p310 = pneg %p67
        %s311 = smul.u32 16, %s23
        %p312 = scmp.lt.s32.totalorder %s311, 31
        %s313 = scalar_select %p312, %s311, 31
        %s314 = smul.addr %s313, 8
        %s315 = scalar_lea.vmem %s2, %s314
        %p316 = pneg %p96
        %p317 = pneg %p93
        %p318 = pneg %p117
        %p319 = pneg %p114
        %p320 = pneg %p138
        %p321 = pneg %p135
        %p322 = pneg %p159
        %p323 = pneg %p156
        %p324 = pneg %p180
        %p325 = pneg %p177
        %p326 = pneg %p206
        %p327 = pneg %p203
        %s328 = sand.u32 %s193, 1
        %s329 = scalar_lea.sflag [#allocation3], %s328
        %s330 = sand.u32 %s193, 1
        %s331 = smul.addr %s330, 128
        %s332 = scalar_lea.vmem [#allocation2], %s331
        %p333 = pneg %p232
        %p334 = pneg %p229
        %s335 = smul.u32 16, %s23
        %p336 = scmp.lt.s32.totalorder %s335, 31
        %s337 = scalar_select %p336, %s335, 31
        %s338 = smul.addr %s337, 8
        %s339 = scalar_lea.vmem %s8, %s338
        %s340 = smul.u32 16, %s23
        %p341 = scmp.lt.s32.totalorder %s340, 31
        %s342 = scalar_select %p341, %s340, 31
        %s343 = smul.addr %s342, 8
        %s344 = scalar_lea.vmem %s0, %s343
        %s345 = smul.u32 16, %s23
        %s346 = smul.u32 16, %s23
        %p347 = scmp.lt.s32.totalorder %s346, 31
        %s348 = scalar_select %p347, %s346, 31
        %s349 = smul.addr %s348, 8
        %s350 = scalar_lea.vmem %s1, %s349
        %s351 = smul.u32 16, %s23
        %s352 = smul.u32 16, %s23
        %p353 = scmp.lt.s32.totalorder %s352, 31
        %s354 = scalar_select %p353, %s352, 31
        %s355 = smul.addr %s354, 8
        %s356 = scalar_lea.vmem %s2, %s355
        %s357 = smul.u32 16, %s23
        %s358 = smul.u32 16, %s23
        %s359 = smul.u32 16, %s23
        %p360 = scmp.lt.s32.totalorder %s359, 31
        %s361 = scalar_select %p360, %s359, 31
        %s362 = smul.addr %s361, 8
        %s363 = scalar_lea.vmem %s8, %s362
        %s364 = smul.u32 16, %s23
        %v365 = vld [vmem:[%s344] sm:$0xff]
        %v366 = vld [vmem:[%s344 + $0x8] sm:$0xff]
        %v367 = vld [vmem:[%s344 + $0x10] sm:$0xff]
        %v368 = vld [vmem:[%s344 + $0x18] sm:$0xff]
        %v369 = vld [vmem:[%s344 + $0x20] sm:$0xff]
        %v370 = vld [vmem:[%s344 + $0x28] sm:$0xff]
        %v371 = vld [vmem:[%s344 + $0x30] sm:$0xff]
        %v372 = vld [vmem:[%s344 + $0x38] sm:$0xff]
        %v373 = vld [vmem:[%s344 + $0x40] sm:$0xff]
        %v374 = vld [vmem:[%s344 + $0x48] sm:$0xff]
        %v375 = vld [vmem:[%s344 + $0x50] sm:$0xff]
        %v376 = vld [vmem:[%s344 + $0x58] sm:$0xff]
        %v377 = vld [vmem:[%s344 + $0x60] sm:$0xff]
        %v378 = vld [vmem:[%s344 + $0x68] sm:$0xff]
        %v379 = vld [vmem:[%s344 + $0x70] sm:$0xff]
        %v380 = vld [vmem:[%s344 + $0x78] sm:$0xff]
        %v381 = vld [vmem:[%s3] sm:$0xff]
        %v382 = vld [vmem:[%s3 + $0x8] sm:$0xff]
        %v383 = vld [vmem:[%s3 + $0x10] sm:$0xff]
        %v384 = vld [vmem:[%s3 + $0x18] sm:$0xff]
        %v385 = vld [vmem:[%s3 + $0x20] sm:$0xff]
        %v386 = vld [vmem:[%s3 + $0x28] sm:$0xff]
        %v387 = vld [vmem:[%s3 + $0x30] sm:$0xff]
        %v388 = vld [vmem:[%s3 + $0x38] sm:$0xff]
        %v389 = vld [vmem:[%s3 + $0x40] sm:$0xff]
        %v390 = vld [vmem:[%s3 + $0x48] sm:$0xff]
        %v391 = vld [vmem:[%s3 + $0x50] sm:$0xff]
        %v392 = vld [vmem:[%s3 + $0x58] sm:$0xff]
        %v393 = vld [vmem:[%s3 + $0x60] sm:$0xff]
        %v394 = vld [vmem:[%s3 + $0x68] sm:$0xff]
        %v395 = vld [vmem:[%s3 + $0x70] sm:$0xff]
        %v396 = vld [vmem:[%s3 + $0x78] sm:$0xff]
        %v397 = vld [vmem:[%s350] sm:$0xff]
        %v398 = vld [vmem:[%s350 + $0x8] sm:$0xff]
        %v399 = vld [vmem:[%s350 + $0x10] sm:$0xff]
        %v400 = vld [vmem:[%s350 + $0x18] sm:$0xff]
        %v401 = vld [vmem:[%s350 + $0x20] sm:$0xff]
        %v402 = vld [vmem:[%s350 + $0x28] sm:$0xff]
        %v403 = vld [vmem:[%s350 + $0x30] sm:$0xff]
        %v404 = vld [vmem:[%s350 + $0x38] sm:$0xff]
        %v405 = vld [vmem:[%s350 + $0x40] sm:$0xff]
        %v406 = vld [vmem:[%s350 + $0x48] sm:$0xff]
        %v407 = vld [vmem:[%s350 + $0x50] sm:$0xff]
        %v408 = vld [vmem:[%s350 + $0x58] sm:$0xff]
        %v409 = vld [vmem:[%s350 + $0x60] sm:$0xff]
        %v410 = vld [vmem:[%s350 + $0x68] sm:$0xff]
        %v411 = vld [vmem:[%s350 + $0x70] sm:$0xff]
        %v412 = vld [vmem:[%s350 + $0x78] sm:$0xff]
        %v413 = vld [vmem:[%s4] sm:$0xff]
        %v414 = vld [vmem:[%s4 + $0x8] sm:$0xff]
        %v415 = vld [vmem:[%s4 + $0x10] sm:$0xff]
        %v416 = vld [vmem:[%s4 + $0x18] sm:$0xff]
        %v417 = vld [vmem:[%s4 + $0x20] sm:$0xff]
        %v418 = vld [vmem:[%s4 + $0x28] sm:$0xff]
        %v419 = vld [vmem:[%s4 + $0x30] sm:$0xff]
        %v420 = vld [vmem:[%s4 + $0x38] sm:$0xff]
        %v421 = vld [vmem:[%s4 + $0x40] sm:$0xff]
        %v422 = vld [vmem:[%s4 + $0x48] sm:$0xff]
        %v423 = vld [vmem:[%s4 + $0x50] sm:$0xff]
        %v424 = vld [vmem:[%s4 + $0x58] sm:$0xff]
        %v425 = vld [vmem:[%s4 + $0x60] sm:$0xff]
        %v426 = vld [vmem:[%s4 + $0x68] sm:$0xff]
        %v427 = vld [vmem:[%s4 + $0x70] sm:$0xff]
        %v428 = vld [vmem:[%s4 + $0x78] sm:$0xff]
        %vm429 = vcmask 523264
        %v431 = vsel %vm429, %v397, 0
        %v434 = vsel %vm429, %v398, 0
        %v437 = vsel %vm429, %v399, 0
        %v440 = vsel %vm429, %v400, 0
        %v443 = vsel %vm429, %v401, 0
        %v446 = vsel %vm429, %v402, 0
        %v449 = vsel %vm429, %v403, 0
        %v452 = vsel %vm429, %v404, 0
        %v455 = vsel %vm429, %v405, 0
        %v458 = vsel %vm429, %v406, 0
        %v461 = vsel %vm429, %v407, 0
        %v464 = vsel %vm429, %v408, 0
        %v467 = vsel %vm429, %v409, 0
        %v470 = vsel %vm429, %v410, 0
        %v473 = vsel %vm429, %v411, 0
        %v476 = vsel %vm429, %v412, 0
        %478 = vmatprep.subr.mxu0 0.0
        %479 = vmatpush1.msra.mxu0 0.0
        %480 = vmatprep.subr.mxu0 0.0
        %481 = vmatpush1.msra.mxu0 0.0
        %482 = vmatprep.subr.mxu0 0.0
        %483 = vmatpush1.msra.mxu0 0.0
        %484 = vmatprep.subr.mxu0 0.0
        %485 = vmatpush1.msra.mxu0 0.0
        %486 = vmatprep.subr.mxu0 0.0
        %487 = vmatpush1.msra.mxu0 0.0
        %488 = vmatprep.subr.mxu0 0.0
        %489 = vmatpush1.msra.mxu0 0.0
        %490 = vmatprep.subr.mxu0 0.0
        %491 = vmatpush1.msra.mxu0 0.0
        %492 = vmatprep.subr.mxu0 0.0
        %493 = vmatpush1.msra.mxu0 0.0
        %494 = vmatprep.subr.mxu0 %v428
        %495 = vmatpush1.msra.mxu0 %v427
        %496 = vmatprep.subr.mxu0 %v426
        %497 = vmatpush1.msra.mxu0 %v425
        %498 = vmatprep.subr.mxu0 %v424
        %499 = vmatpush1.msra.mxu0 %v423
        %500 = vmatprep.subr.mxu0 %v422
        %501 = vmatpush1.msra.mxu0 %v421
        %502 = vmatprep.subr.mxu0 %v420
        %503 = vmatpush1.msra.mxu0 %v419
        %504 = vmatprep.subr.mxu0 %v418
        %505 = vmatpush1.msra.mxu0 %v417
        %506 = vmatprep.subr.mxu0 %v416
        %507 = vmatpush1.msra.mxu0 %v415
        %508 = vmatprep.subr.mxu0 %v414
        %509 = vmatpush1.msra.mxu0 %v413
        %510 = vmatprep.subr.mxu0 0.0
        %511 = vmatpush2.msra.mxu0 0.0
        %512 = vmatprep.subr.mxu0 0.0
        %513 = vmatpush2.msra.mxu0 0.0
        %514 = vmatprep.subr.mxu0 0.0
        %515 = vmatpush2.msra.mxu0 0.0
        %516 = vmatprep.subr.mxu0 0.0
        %517 = vmatpush2.msra.mxu0 0.0
        %518 = vmatprep.subr.mxu0 0.0
        %519 = vmatpush2.msra.mxu0 0.0
        %520 = vmatprep.subr.mxu0 0.0
        %521 = vmatpush2.msra.mxu0 0.0
        %522 = vmatprep.subr.mxu0 0.0
        %523 = vmatpush2.msra.mxu0 0.0
        %524 = vmatprep.subr.mxu0 0.0
        %525 = vmatpush2.msra.mxu0 0.0
        %526 = vmatprep.subr.mxu0 0.0
        %527 = vmatpush2.msra.mxu0 0.0
        %528 = vmatprep.subr.mxu0 0.0
        %529 = vmatpush2.msra.mxu0 0.0
        %530 = vmatprep.subr.mxu0 0.0
        %531 = vmatpush2.msra.mxu0 0.0
        %532 = vmatprep.subr.mxu0 0.0
        %533 = vmatpush2.msra.mxu0 0.0
        %534 = vmatprep.subr.mxu0 0.0
        %535 = vmatpush2.msra.mxu0 0.0
        %536 = vmatprep.subr.mxu0 0.0
        %537 = vmatpush2.msra.mxu0 0.0
        %538 = vmatprep.subr.mxu0 0.0
        %539 = vmatpush2.msra.mxu0 0.0
        %540 = vmatprep.subr.mxu0 0.0
        %541 = vmatpush2.msra.mxu0 0.0
        %542 = vmatprep.mubr.f32.mxu0 0.0
        %543 = vmatmul.mubr.f32.gmra.mxu0 %v431
        %v544 = vpop.f32.mrf.mxu0
        %v545 = vadd.f32 0.0, %v544
        %v546 = vpop.f32.mrf.mxu0
        %v547 = vadd.f32 0.0, %v546
        %548 = vmatprep.mubr.f32.mxu0 0.0
        %549 = vmatmul.mubr.f32.gmra.mxu0 %v434
        %v550 = vpop.f32.mrf.mxu0
        %v551 = vadd.f32 0.0, %v550
        %v552 = vpop.f32.mrf.mxu0
        %v553 = vadd.f32 0.0, %v552
        %554 = vmatprep.mubr.f32.mxu0 0.0
        %555 = vmatmul.mubr.f32.gmra.mxu0 %v437
        %v556 = vpop.f32.mrf.mxu0
        %v557 = vadd.f32 0.0, %v556
        %v558 = vpop.f32.mrf.mxu0
        %v559 = vadd.f32 0.0, %v558
        %560 = vmatprep.mubr.f32.mxu0 0.0
        %561 = vmatmul.mubr.f32.gmra.mxu0 %v440
        %v562 = vpop.f32.mrf.mxu0
        %v563 = vadd.f32 0.0, %v562
        %v564 = vpop.f32.mrf.mxu0
        %v565 = vadd.f32 0.0, %v564
        %566 = vmatprep.mubr.f32.mxu0 0.0
        %567 = vmatmul.mubr.f32.gmra.mxu0 %v443
        %v568 = vpop.f32.mrf.mxu0
        %v569 = vadd.f32 0.0, %v568
        %v570 = vpop.f32.mrf.mxu0
        %v571 = vadd.f32 0.0, %v570
        %572 = vmatprep.mubr.f32.mxu0 0.0
        %573 = vmatmul.mubr.f32.gmra.mxu0 %v446
        %v574 = vpop.f32.mrf.mxu0
        %v575 = vadd.f32 0.0, %v574
        %v576 = vpop.f32.mrf.mxu0
        %v577 = vadd.f32 0.0, %v576
        %578 = vmatprep.mubr.f32.mxu0 0.0
        %579 = vmatmul.mubr.f32.gmra.mxu0 %v449
        %v580 = vpop.f32.mrf.mxu0
        %v581 = vadd.f32 0.0, %v580
        %v582 = vpop.f32.mrf.mxu0
        %v583 = vadd.f32 0.0, %v582
        %584 = vmatprep.mubr.f32.mxu0 0.0
        %585 = vmatmul.mubr.f32.gmra.mxu0 %v452
        %v586 = vpop.f32.mrf.mxu0
        %v587 = vadd.f32 0.0, %v586
        %v588 = vpop.f32.mrf.mxu0
        %v589 = vadd.f32 0.0, %v588
        %590 = vmatprep.mubr.f32.mxu0 0.0
        %591 = vmatmul.mubr.f32.gmra.mxu0 %v455
        %v592 = vpop.f32.mrf.mxu0
        %v593 = vadd.f32 0.0, %v592
        %v594 = vpop.f32.mrf.mxu0
        %v595 = vadd.f32 0.0, %v594
        %596 = vmatprep.mubr.f32.mxu0 0.0
        %597 = vmatmul.mubr.f32.gmra.mxu0 %v458
        %v598 = vpop.f32.mrf.mxu0
        %v599 = vadd.f32 0.0, %v598
        %v600 = vpop.f32.mrf.mxu0
        %v601 = vadd.f32 0.0, %v600
        %602 = vmatprep.mubr.f32.mxu0 0.0
        %603 = vmatmul.mubr.f32.gmra.mxu0 %v461
        %v604 = vpop.f32.mrf.mxu0
        %v605 = vadd.f32 0.0, %v604
        %v606 = vpop.f32.mrf.mxu0
        %v607 = vadd.f32 0.0, %v606
        %608 = vmatprep.mubr.f32.mxu0 0.0
        %609 = vmatmul.mubr.f32.gmra.mxu0 %v464
        %v610 = vpop.f32.mrf.mxu0
        %v611 = vadd.f32 0.0, %v610
        %v612 = vpop.f32.mrf.mxu0
        %v613 = vadd.f32 0.0, %v612
        %614 = vmatprep.mubr.f32.mxu0 0.0
        %615 = vmatmul.mubr.f32.gmra.mxu0 %v467
        %v616 = vpop.f32.mrf.mxu0
        %v617 = vadd.f32 0.0, %v616
        %v618 = vpop.f32.mrf.mxu0
        %v619 = vadd.f32 0.0, %v618
        %620 = vmatprep.mubr.f32.mxu0 0.0
        %621 = vmatmul.mubr.f32.gmra.mxu0 %v470
        %v622 = vpop.f32.mrf.mxu0
        %v623 = vadd.f32 0.0, %v622
        %v624 = vpop.f32.mrf.mxu0
        %v625 = vadd.f32 0.0, %v624
        %626 = vmatprep.mubr.f32.mxu0 0.0
        %627 = vmatmul.mubr.f32.gmra.mxu0 %v473
        %v628 = vpop.f32.mrf.mxu0
        %v629 = vadd.f32 0.0, %v628
        %v630 = vpop.f32.mrf.mxu0
        %v631 = vadd.f32 0.0, %v630
        %632 = vmatprep.mubr.f32.mxu0 0.0
        %633 = vmatmul.mubr.f32.gmra.mxu0 %v476
        %v634 = vpop.f32.mrf.mxu0
        %v635 = vadd.f32 0.0, %v634
        %v636 = vpop.f32.mrf.mxu0
        %v637 = vadd.f32 0.0, %v636
        %638 = vdwg.mxu0
        %v640 = vsel %vm429, %v365, 0
        %v643 = vsel %vm429, %v366, 0
        %v646 = vsel %vm429, %v367, 0
        %v649 = vsel %vm429, %v368, 0
        %v652 = vsel %vm429, %v369, 0
        %v655 = vsel %vm429, %v370, 0
        %v658 = vsel %vm429, %v371, 0
        %v661 = vsel %vm429, %v372, 0
        %v664 = vsel %vm429, %v373, 0
        %v667 = vsel %vm429, %v374, 0
        %v670 = vsel %vm429, %v375, 0
        %v673 = vsel %vm429, %v376, 0
        %v676 = vsel %vm429, %v377, 0
        %v679 = vsel %vm429, %v378, 0
        %v682 = vsel %vm429, %v379, 0
        %v685 = vsel %vm429, %v380, 0
        %687 = vmatprep.subr.mxu0 0.0
        %688 = vmatpush1.msra.mxu0 0.0
        %689 = vmatprep.subr.mxu0 0.0
        %690 = vmatpush1.msra.mxu0 0.0
        %691 = vmatprep.subr.mxu0 0.0
        %692 = vmatpush1.msra.mxu0 0.0
        %693 = vmatprep.subr.mxu0 0.0
        %694 = vmatpush1.msra.mxu0 0.0
        %695 = vmatprep.subr.mxu0 0.0
        %696 = vmatpush1.msra.mxu0 0.0
        %697 = vmatprep.subr.mxu0 0.0
        %698 = vmatpush1.msra.mxu0 0.0
        %699 = vmatprep.subr.mxu0 0.0
        %700 = vmatpush1.msra.mxu0 0.0
        %701 = vmatprep.subr.mxu0 0.0
        %702 = vmatpush1.msra.mxu0 0.0
        %703 = vmatprep.subr.mxu0 %v396
        %704 = vmatpush1.msra.mxu0 %v395
        %705 = vmatprep.subr.mxu0 %v394
        %706 = vmatpush1.msra.mxu0 %v393
        %707 = vmatprep.subr.mxu0 %v392
        %708 = vmatpush1.msra.mxu0 %v391
        %709 = vmatprep.subr.mxu0 %v390
        %710 = vmatpush1.msra.mxu0 %v389
        %711 = vmatprep.subr.mxu0 %v388
        %712 = vmatpush1.msra.mxu0 %v387
        %713 = vmatprep.subr.mxu0 %v386
        %714 = vmatpush1.msra.mxu0 %v385
        %715 = vmatprep.subr.mxu0 %v384
        %716 = vmatpush1.msra.mxu0 %v383
        %717 = vmatprep.subr.mxu0 %v382
        %718 = vmatpush1.msra.mxu0 %v381
        %719 = vmatprep.subr.mxu0 0.0
        %720 = vmatpush2.msra.mxu0 0.0
        %721 = vmatprep.subr.mxu0 0.0
        %722 = vmatpush2.msra.mxu0 0.0
        %723 = vmatprep.subr.mxu0 0.0
        %724 = vmatpush2.msra.mxu0 0.0
        %725 = vmatprep.subr.mxu0 0.0
        %726 = vmatpush2.msra.mxu0 0.0
        %727 = vmatprep.subr.mxu0 0.0
        %728 = vmatpush2.msra.mxu0 0.0
        %729 = vmatprep.subr.mxu0 0.0
        %730 = vmatpush2.msra.mxu0 0.0
        %731 = vmatprep.subr.mxu0 0.0
        %732 = vmatpush2.msra.mxu0 0.0
        %733 = vmatprep.subr.mxu0 0.0
        %734 = vmatpush2.msra.mxu0 0.0
        %735 = vmatprep.subr.mxu0 0.0
        %736 = vmatpush2.msra.mxu0 0.0
        %737 = vmatprep.subr.mxu0 0.0
        %738 = vmatpush2.msra.mxu0 0.0
        %739 = vmatprep.subr.mxu0 0.0
        %740 = vmatpush2.msra.mxu0 0.0
        %741 = vmatprep.subr.mxu0 0.0
        %742 = vmatpush2.msra.mxu0 0.0
        %743 = vmatprep.subr.mxu0 0.0
        %744 = vmatpush2.msra.mxu0 0.0
        %745 = vmatprep.subr.mxu0 0.0
        %746 = vmatpush2.msra.mxu0 0.0
        %747 = vmatprep.subr.mxu0 0.0
        %748 = vmatpush2.msra.mxu0 0.0
        %749 = vmatprep.subr.mxu0 0.0
        %750 = vmatpush2.msra.mxu0 0.0
        %751 = vmatprep.mubr.f32.mxu0 0.0
        %752 = vmatmul.mubr.f32.gmra.mxu0 %v640
        %v753 = vpop.f32.mrf.mxu0
        %v754 = vadd.f32 %v545, %v753
        %v755 = vpop.f32.mrf.mxu0
        %v756 = vadd.f32 %v547, %v755
        %757 = vmatprep.mubr.f32.mxu0 0.0
        %758 = vmatmul.mubr.f32.gmra.mxu0 %v643
        %v759 = vpop.f32.mrf.mxu0
        %v760 = vadd.f32 %v551, %v759
        %v761 = vpop.f32.mrf.mxu0
        %v762 = vadd.f32 %v553, %v761
        %763 = vmatprep.mubr.f32.mxu0 0.0
        %764 = vmatmul.mubr.f32.gmra.mxu0 %v646
        %v765 = vpop.f32.mrf.mxu0
        %v766 = vadd.f32 %v557, %v765
        %v767 = vpop.f32.mrf.mxu0
        %v768 = vadd.f32 %v559, %v767
        %769 = vmatprep.mubr.f32.mxu0 0.0
        %770 = vmatmul.mubr.f32.gmra.mxu0 %v649
        %v771 = vpop.f32.mrf.mxu0
        %v772 = vadd.f32 %v563, %v771
        %v773 = vpop.f32.mrf.mxu0
        %v774 = vadd.f32 %v565, %v773
        %775 = vmatprep.mubr.f32.mxu0 0.0
        %776 = vmatmul.mubr.f32.gmra.mxu0 %v652
        %v777 = vpop.f32.mrf.mxu0
        %v778 = vadd.f32 %v569, %v777
        %v779 = vpop.f32.mrf.mxu0
        %v780 = vadd.f32 %v571, %v779
        %781 = vmatprep.mubr.f32.mxu0 0.0
        %782 = vmatmul.mubr.f32.gmra.mxu0 %v655
        %v783 = vpop.f32.mrf.mxu0
        %v784 = vadd.f32 %v575, %v783
        %v785 = vpop.f32.mrf.mxu0
        %v786 = vadd.f32 %v577, %v785
        %787 = vmatprep.mubr.f32.mxu0 0.0
        %788 = vmatmul.mubr.f32.gmra.mxu0 %v658
        %v789 = vpop.f32.mrf.mxu0
        %v790 = vadd.f32 %v581, %v789
        %v791 = vpop.f32.mrf.mxu0
        %v792 = vadd.f32 %v583, %v791
        %793 = vmatprep.mubr.f32.mxu0 0.0
        %794 = vmatmul.mubr.f32.gmra.mxu0 %v661
        %v795 = vpop.f32.mrf.mxu0
        %v796 = vadd.f32 %v587, %v795
        %v797 = vpop.f32.mrf.mxu0
        %v798 = vadd.f32 %v589, %v797
        %799 = vmatprep.mubr.f32.mxu0 0.0
        %800 = vmatmul.mubr.f32.gmra.mxu0 %v664
        %v801 = vpop.f32.mrf.mxu0
        %v802 = vadd.f32 %v593, %v801
        %v803 = vpop.f32.mrf.mxu0
        %v804 = vadd.f32 %v595, %v803
        %805 = vmatprep.mubr.f32.mxu0 0.0
        %806 = vmatmul.mubr.f32.gmra.mxu0 %v667
        %v807 = vpop.f32.mrf.mxu0
        %v808 = vadd.f32 %v599, %v807
        %v809 = vpop.f32.mrf.mxu0
        %v810 = vadd.f32 %v601, %v809
        %811 = vmatprep.mubr.f32.mxu0 0.0
        %812 = vmatmul.mubr.f32.gmra.mxu0 %v670
        %v813 = vpop.f32.mrf.mxu0
        %v814 = vadd.f32 %v605, %v813
        %v815 = vpop.f32.mrf.mxu0
        %v816 = vadd.f32 %v607, %v815
        %817 = vmatprep.mubr.f32.mxu0 0.0
        %818 = vmatmul.mubr.f32.gmra.mxu0 %v673
        %v819 = vpop.f32.mrf.mxu0
        %v820 = vadd.f32 %v611, %v819
        %v821 = vpop.f32.mrf.mxu0
        %v822 = vadd.f32 %v613, %v821
        %823 = vmatprep.mubr.f32.mxu0 0.0
        %824 = vmatmul.mubr.f32.gmra.mxu0 %v676
        %v825 = vpop.f32.mrf.mxu0
        %v826 = vadd.f32 %v617, %v825
        %v827 = vpop.f32.mrf.mxu0
        %v828 = vadd.f32 %v619, %v827
        %829 = vmatprep.mubr.f32.mxu0 0.0
        %830 = vmatmul.mubr.f32.gmra.mxu0 %v679
        %v831 = vpop.f32.mrf.mxu0
        %v832 = vadd.f32 %v623, %v831
        %v833 = vpop.f32.mrf.mxu0
        %v834 = vadd.f32 %v625, %v833
        %835 = vmatprep.mubr.f32.mxu0 0.0
        %836 = vmatmul.mubr.f32.gmra.mxu0 %v682
        %v837 = vpop.f32.mrf.mxu0
        %v838 = vadd.f32 %v629, %v837
        %v839 = vpop.f32.mrf.mxu0
        %v840 = vadd.f32 %v631, %v839
        %841 = vmatprep.mubr.f32.mxu0 0.0
        %842 = vmatmul.mubr.f32.gmra.mxu0 %v685
        %v843 = vpop.f32.mrf.mxu0
        %v844 = vadd.f32 %v635, %v843
        %v845 = vpop.f32.mrf.mxu0
        %v846 = vadd.f32 %v637, %v845
        %847 = vdwg.mxu0
        %v848 = vld [vmem:[%s356] sm:$0xff]
        %v849 = vld [vmem:[%s356 + $0x8] sm:$0xff]
        %v850 = vld [vmem:[%s356 + $0x10] sm:$0xff]
        %v851 = vld [vmem:[%s356 + $0x18] sm:$0xff]
        %v852 = vld [vmem:[%s356 + $0x20] sm:$0xff]
        %v853 = vld [vmem:[%s356 + $0x28] sm:$0xff]
        %v854 = vld [vmem:[%s356 + $0x30] sm:$0xff]
        %v855 = vld [vmem:[%s356 + $0x38] sm:$0xff]
        %v856 = vld [vmem:[%s356 + $0x40] sm:$0xff]
        %v857 = vld [vmem:[%s356 + $0x48] sm:$0xff]
        %v858 = vld [vmem:[%s356 + $0x50] sm:$0xff]
        %v859 = vld [vmem:[%s356 + $0x58] sm:$0xff]
        %v860 = vld [vmem:[%s356 + $0x60] sm:$0xff]
        %v861 = vld [vmem:[%s356 + $0x68] sm:$0xff]
        %v862 = vld [vmem:[%s356 + $0x70] sm:$0xff]
        %v863 = vld [vmem:[%s356 + $0x78] sm:$0xff]
        %v864 = vld [vmem:[%s5] sm:$0xff]
        %v865 = vld [vmem:[%s5 + $0x8] sm:$0xff]
        %v866 = vld [vmem:[%s5 + $0x10] sm:$0xff]
        %v867 = vld [vmem:[%s5 + $0x18] sm:$0xff]
        %v868 = vld [vmem:[%s5 + $0x20] sm:$0xff]
        %v869 = vld [vmem:[%s5 + $0x28] sm:$0xff]
        %v870 = vld [vmem:[%s5 + $0x30] sm:$0xff]
        %v871 = vld [vmem:[%s5 + $0x38] sm:$0xff]
        %vm872 = vcmask 261120
        %v874 = vsel %vm872, %v848, 0
        %v877 = vsel %vm872, %v849, 0
        %v880 = vsel %vm872, %v850, 0
        %v883 = vsel %vm872, %v851, 0
        %v886 = vsel %vm872, %v852, 0
        %v889 = vsel %vm872, %v853, 0
        %v892 = vsel %vm872, %v854, 0
        %v895 = vsel %vm872, %v855, 0
        %v898 = vsel %vm872, %v856, 0
        %v901 = vsel %vm872, %v857, 0
        %v904 = vsel %vm872, %v858, 0
        %v907 = vsel %vm872, %v859, 0
        %v910 = vsel %vm872, %v860, 0
        %v913 = vsel %vm872, %v861, 0
        %v916 = vsel %vm872, %v862, 0
        %v919 = vsel %vm872, %v863, 0
        %921 = vmatprep.subr.mxu0 0.0
        %922 = vmatpush1.msra.mxu0 0.0
        %923 = vmatprep.subr.mxu0 0.0
        %924 = vmatpush1.msra.mxu0 0.0
        %925 = vmatprep.subr.mxu0 0.0
        %926 = vmatpush1.msra.mxu0 0.0
        %927 = vmatprep.subr.mxu0 0.0
        %928 = vmatpush1.msra.mxu0 0.0
        %929 = vmatprep.subr.mxu0 0.0
        %930 = vmatpush1.msra.mxu0 0.0
        %931 = vmatprep.subr.mxu0 0.0
        %932 = vmatpush1.msra.mxu0 0.0
        %933 = vmatprep.subr.mxu0 0.0
        %934 = vmatpush1.msra.mxu0 0.0
        %935 = vmatprep.subr.mxu0 0.0
        %936 = vmatpush1.msra.mxu0 0.0
        %937 = vmatprep.subr.mxu0 0.0
        %938 = vmatpush1.msra.mxu0 0.0
        %939 = vmatprep.subr.mxu0 0.0
        %940 = vmatpush1.msra.mxu0 0.0
        %941 = vmatprep.subr.mxu0 0.0
        %942 = vmatpush1.msra.mxu0 0.0
        %943 = vmatprep.subr.mxu0 0.0
        %944 = vmatpush1.msra.mxu0 0.0
        %945 = vmatprep.subr.mxu0 %v871
        %946 = vmatpush1.msra.mxu0 %v870
        %947 = vmatprep.subr.mxu0 %v869
        %948 = vmatpush1.msra.mxu0 %v868
        %949 = vmatprep.subr.mxu0 %v867
        %950 = vmatpush1.msra.mxu0 %v866
        %951 = vmatprep.subr.mxu0 %v865
        %952 = vmatpush1.msra.mxu0 %v864
        %953 = vmatprep.subr.mxu0 0.0
        %954 = vmatpush2.msra.mxu0 0.0
        %955 = vmatprep.subr.mxu0 0.0
        %956 = vmatpush2.msra.mxu0 0.0
        %957 = vmatprep.subr.mxu0 0.0
        %958 = vmatpush2.msra.mxu0 0.0
        %959 = vmatprep.subr.mxu0 0.0
        %960 = vmatpush2.msra.mxu0 0.0
        %961 = vmatprep.subr.mxu0 0.0
        %962 = vmatpush2.msra.mxu0 0.0
        %963 = vmatprep.subr.mxu0 0.0
        %964 = vmatpush2.msra.mxu0 0.0
        %965 = vmatprep.subr.mxu0 0.0
        %966 = vmatpush2.msra.mxu0 0.0
        %967 = vmatprep.subr.mxu0 0.0
        %968 = vmatpush2.msra.mxu0 0.0
        %969 = vmatprep.subr.mxu0 0.0
        %970 = vmatpush2.msra.mxu0 0.0
        %971 = vmatprep.subr.mxu0 0.0
        %972 = vmatpush2.msra.mxu0 0.0
        %973 = vmatprep.subr.mxu0 0.0
        %974 = vmatpush2.msra.mxu0 0.0
        %975 = vmatprep.subr.mxu0 0.0
        %976 = vmatpush2.msra.mxu0 0.0
        %977 = vmatprep.subr.mxu0 0.0
        %978 = vmatpush2.msra.mxu0 0.0
        %979 = vmatprep.subr.mxu0 0.0
        %980 = vmatpush2.msra.mxu0 0.0
        %981 = vmatprep.subr.mxu0 0.0
        %982 = vmatpush2.msra.mxu0 0.0
        %983 = vmatprep.subr.mxu0 0.0
        %984 = vmatpush2.msra.mxu0 0.0
        %985 = vmatprep.mubr.f32.mxu0 0.0
        %986 = vmatmul.mubr.f32.gmra.mxu0 %v874
        %v987 = vpop.f32.mrf.mxu0
        %v988 = vadd.f32 0.0, %v987
        %v989 = vpop.f32.mrf.mxu0
        %v990 = vadd.f32 0.0, %v989
        %991 = vmatprep.mubr.f32.mxu0 0.0
        %992 = vmatmul.mubr.f32.gmra.mxu0 %v877
        %v993 = vpop.f32.mrf.mxu0
        %v994 = vadd.f32 0.0, %v993
        %v995 = vpop.f32.mrf.mxu0
        %v996 = vadd.f32 0.0, %v995
        %997 = vmatprep.mubr.f32.mxu0 0.0
        %998 = vmatmul.mubr.f32.gmra.mxu0 %v880
        %v999 = vpop.f32.mrf.mxu0
        %v1000 = vadd.f32 0.0, %v999
        %v1001 = vpop.f32.mrf.mxu0
        %v1002 = vadd.f32 0.0, %v1001
        %1003 = vmatprep.mubr.f32.mxu0 0.0
        %1004 = vmatmul.mubr.f32.gmra.mxu0 %v883
        %v1005 = vpop.f32.mrf.mxu0
        %v1006 = vadd.f32 0.0, %v1005
        %v1007 = vpop.f32.mrf.mxu0
        %v1008 = vadd.f32 0.0, %v1007
        %1009 = vmatprep.mubr.f32.mxu0 0.0
        %1010 = vmatmul.mubr.f32.gmra.mxu0 %v886
        %v1011 = vpop.f32.mrf.mxu0
        %v1012 = vadd.f32 0.0, %v1011
        %v1013 = vpop.f32.mrf.mxu0
        %v1014 = vadd.f32 0.0, %v1013
        %1015 = vmatprep.mubr.f32.mxu0 0.0
        %1016 = vmatmul.mubr.f32.gmra.mxu0 %v889
        %v1017 = vpop.f32.mrf.mxu0
        %v1018 = vadd.f32 0.0, %v1017
        %v1019 = vpop.f32.mrf.mxu0
        %v1020 = vadd.f32 0.0, %v1019
        %1021 = vmatprep.mubr.f32.mxu0 0.0
        %1022 = vmatmul.mubr.f32.gmra.mxu0 %v892
        %v1023 = vpop.f32.mrf.mxu0
        %v1024 = vadd.f32 0.0, %v1023
        %v1025 = vpop.f32.mrf.mxu0
        %v1026 = vadd.f32 0.0, %v1025
        %1027 = vmatprep.mubr.f32.mxu0 0.0
        %1028 = vmatmul.mubr.f32.gmra.mxu0 %v895
        %v1029 = vpop.f32.mrf.mxu0
        %v1030 = vadd.f32 0.0, %v1029
        %v1031 = vpop.f32.mrf.mxu0
        %v1032 = vadd.f32 0.0, %v1031
        %1033 = vmatprep.mubr.f32.mxu0 0.0
        %1034 = vmatmul.mubr.f32.gmra.mxu0 %v898
        %v1035 = vpop.f32.mrf.mxu0
        %v1036 = vadd.f32 0.0, %v1035
        %v1037 = vpop.f32.mrf.mxu0
        %v1038 = vadd.f32 0.0, %v1037
        %1039 = vmatprep.mubr.f32.mxu0 0.0
        %1040 = vmatmul.mubr.f32.gmra.mxu0 %v901
        %v1041 = vpop.f32.mrf.mxu0
        %v1042 = vadd.f32 0.0, %v1041
        %v1043 = vpop.f32.mrf.mxu0
        %v1044 = vadd.f32 0.0, %v1043
        %1045 = vmatprep.mubr.f32.mxu0 0.0
        %1046 = vmatmul.mubr.f32.gmra.mxu0 %v904
        %v1047 = vpop.f32.mrf.mxu0
        %v1048 = vadd.f32 0.0, %v1047
        %v1049 = vpop.f32.mrf.mxu0
        %v1050 = vadd.f32 0.0, %v1049
        %1051 = vmatprep.mubr.f32.mxu0 0.0
        %1052 = vmatmul.mubr.f32.gmra.mxu0 %v907
        %v1053 = vpop.f32.mrf.mxu0
        %v1054 = vadd.f32 0.0, %v1053
        %v1055 = vpop.f32.mrf.mxu0
        %v1056 = vadd.f32 0.0, %v1055
        %1057 = vmatprep.mubr.f32.mxu0 0.0
        %1058 = vmatmul.mubr.f32.gmra.mxu0 %v910
        %v1059 = vpop.f32.mrf.mxu0
        %v1060 = vadd.f32 0.0, %v1059
        %v1061 = vpop.f32.mrf.mxu0
        %v1062 = vadd.f32 0.0, %v1061
        %1063 = vmatprep.mubr.f32.mxu0 0.0
        %1064 = vmatmul.mubr.f32.gmra.mxu0 %v913
        %v1065 = vpop.f32.mrf.mxu0
        %v1066 = vadd.f32 0.0, %v1065
        %v1067 = vpop.f32.mrf.mxu0
        %v1068 = vadd.f32 0.0, %v1067
        %1069 = vmatprep.mubr.f32.mxu0 0.0
        %1070 = vmatmul.mubr.f32.gmra.mxu0 %v916
        %v1071 = vpop.f32.mrf.mxu0
        %v1072 = vadd.f32 0.0, %v1071
        %v1073 = vpop.f32.mrf.mxu0
        %v1074 = vadd.f32 0.0, %v1073
        %1075 = vmatprep.mubr.f32.mxu0 0.0
        %1076 = vmatmul.mubr.f32.gmra.mxu0 %v919
        %v1077 = vpop.f32.mrf.mxu0
        %v1078 = vadd.f32 0.0, %v1077
        %v1079 = vpop.f32.mrf.mxu0
        %v1080 = vadd.f32 0.0, %v1079
        %1081 = vdwg.mxu0
        %v1082 = vadd.f32 %v754, %v988
        %v1083 = vadd.f32 %v756, %v990
        %v1084 = vadd.f32 %v760, %v994
        %v1085 = vadd.f32 %v762, %v996
        %v1086 = vadd.f32 %v766, %v1000
        %v1087 = vadd.f32 %v768, %v1002
        %v1088 = vadd.f32 %v772, %v1006
        %v1089 = vadd.f32 %v774, %v1008
        %v1090 = vadd.f32 %v778, %v1012
        %v1091 = vadd.f32 %v780, %v1014
        %v1092 = vadd.f32 %v784, %v1018
        %v1093 = vadd.f32 %v786, %v1020
        %v1094 = vadd.f32 %v790, %v1024
        %v1095 = vadd.f32 %v792, %v1026
        %v1096 = vadd.f32 %v796, %v1030
        %v1097 = vadd.f32 %v798, %v1032
        %v1098 = vadd.f32 %v802, %v1036
        %v1099 = vadd.f32 %v804, %v1038
        %v1100 = vadd.f32 %v808, %v1042
        %v1101 = vadd.f32 %v810, %v1044
        %v1102 = vadd.f32 %v814, %v1048
        %v1103 = vadd.f32 %v816, %v1050
        %v1104 = vadd.f32 %v820, %v1054
        %v1105 = vadd.f32 %v822, %v1056
        %v1106 = vadd.f32 %v826, %v1060
        %v1107 = vadd.f32 %v828, %v1062
        %v1108 = vadd.f32 %v832, %v1066
        %v1109 = vadd.f32 %v834, %v1068
        %v1110 = vadd.f32 %v838, %v1072
        %v1111 = vadd.f32 %v840, %v1074
        %v1112 = vadd.f32 %v844, %v1078
        %v1113 = vadd.f32 %v846, %v1080
        %v1114 = vld [vmem:[%s6] sm:$0x3]
        %v1116 = vlaneseq
        %v1117 = vshrl.u32 %v1116, 7
        %v1118 = vsub.s32 0, %v1117
        %v1119 = vrot.slane %v1114, %v1118
        %v1120 = vlaneseq
        %v1121 = vshrl.u32 %v1120, 7
        %v1122 = vsub.s32 1, %v1121
        %v1123 = vrot.slane %v1114, %v1122
        %v1126 = vadd.f32 %v1082, %v1119
        %v1127 = vadd.f32 %v1083, %v1123
        %v1128 = vadd.f32 %v1084, %v1119
        %v1129 = vadd.f32 %v1085, %v1123
        %v1130 = vadd.f32 %v1086, %v1119
        %v1131 = vadd.f32 %v1087, %v1123
        %v1132 = vadd.f32 %v1088, %v1119
        %v1133 = vadd.f32 %v1089, %v1123
        %v1134 = vadd.f32 %v1090, %v1119
        %v1135 = vadd.f32 %v1091, %v1123
        %v1136 = vadd.f32 %v1092, %v1119
        %v1137 = vadd.f32 %v1093, %v1123
        %v1138 = vadd.f32 %v1094, %v1119
        %v1139 = vadd.f32 %v1095, %v1123
        %v1140 = vadd.f32 %v1096, %v1119
        %v1141 = vadd.f32 %v1097, %v1123
        %v1142 = vadd.f32 %v1098, %v1119
        %v1143 = vadd.f32 %v1099, %v1123
        %v1144 = vadd.f32 %v1100, %v1119
        %v1145 = vadd.f32 %v1101, %v1123
        %v1146 = vadd.f32 %v1102, %v1119
        %v1147 = vadd.f32 %v1103, %v1123
        %v1148 = vadd.f32 %v1104, %v1119
        %v1149 = vadd.f32 %v1105, %v1123
        %v1150 = vadd.f32 %v1106, %v1119
        %v1151 = vadd.f32 %v1107, %v1123
        %v1152 = vadd.f32 %v1108, %v1119
        %v1153 = vadd.f32 %v1109, %v1123
        %v1154 = vadd.f32 %v1110, %v1119
        %v1155 = vadd.f32 %v1111, %v1123
        %v1156 = vadd.f32 %v1112, %v1119
        %v1157 = vadd.f32 %v1113, %v1123
        %v1158 = vxor.u32 %v1127, 2147483648
        %v1159 = vxor.u32 %v1129, 2147483648
        %v1160 = vxor.u32 %v1131, 2147483648
        %v1161 = vxor.u32 %v1133, 2147483648
        %v1162 = vxor.u32 %v1135, 2147483648
        %v1163 = vxor.u32 %v1137, 2147483648
        %v1164 = vxor.u32 %v1139, 2147483648
        %v1165 = vxor.u32 %v1141, 2147483648
        %v1166 = vxor.u32 %v1143, 2147483648
        %v1167 = vxor.u32 %v1145, 2147483648
        %v1168 = vxor.u32 %v1147, 2147483648
        %v1169 = vxor.u32 %v1149, 2147483648
        %v1170 = vxor.u32 %v1151, 2147483648
        %v1171 = vxor.u32 %v1153, 2147483648
        %v1172 = vxor.u32 %v1155, 2147483648
        %v1173 = vxor.u32 %v1157, 2147483648
        %v1174 = vmul.f32 %v1158, 1.442695
        %v1175 = vpow.pop %v1174
        %v1176 = vmul.f32 %v1159, 1.442695
        %v1177 = vpow.pop %v1176
        %v1178 = vmul.f32 %v1160, 1.442695
        %v1179 = vpow.pop %v1178
        %v1180 = vmul.f32 %v1161, 1.442695
        %v1181 = vpow.pop %v1180
        %v1182 = vmul.f32 %v1162, 1.442695
        %v1183 = vpow.pop %v1182
        %v1184 = vmul.f32 %v1163, 1.442695
        %v1185 = vpow.pop %v1184
        %v1186 = vmul.f32 %v1164, 1.442695
        %v1187 = vpow.pop %v1186
        %v1188 = vmul.f32 %v1165, 1.442695
        %v1189 = vpow.pop %v1188
        %v1190 = vmul.f32 %v1166, 1.442695
        %v1191 = vpow.pop %v1190
        %v1192 = vmul.f32 %v1167, 1.442695
        %v1193 = vpow.pop %v1192
        %v1194 = vmul.f32 %v1168, 1.442695
        %v1195 = vpow.pop %v1194
        %v1196 = vmul.f32 %v1169, 1.442695
        %v1197 = vpow.pop %v1196
        %v1198 = vmul.f32 %v1170, 1.442695
        %v1199 = vpow.pop %v1198
        %v1200 = vmul.f32 %v1171, 1.442695
        %v1201 = vpow.pop %v1200
        %v1202 = vmul.f32 %v1172, 1.442695
        %v1203 = vpow.pop %v1202
        %v1204 = vmul.f32 %v1173, 1.442695
        %v1205 = vpow.pop %v1204
        %v1206 = vadd.f32 %v1175, 1.0
        %v1207 = vadd.f32 %v1177, 1.0
        %v1208 = vadd.f32 %v1179, 1.0
        %v1209 = vadd.f32 %v1181, 1.0
        %v1210 = vadd.f32 %v1183, 1.0
        %v1211 = vadd.f32 %v1185, 1.0
        %v1212 = vadd.f32 %v1187, 1.0
        %v1213 = vadd.f32 %v1189, 1.0
        %v1214 = vadd.f32 %v1191, 1.0
        %v1215 = vadd.f32 %v1193, 1.0
        %v1216 = vadd.f32 %v1195, 1.0
        %v1217 = vadd.f32 %v1197, 1.0
        %v1218 = vadd.f32 %v1199, 1.0
        %v1219 = vadd.f32 %v1201, 1.0
        %v1220 = vadd.f32 %v1203, 1.0
        %v1221 = vadd.f32 %v1205, 1.0
        %v1222 = vrcp.pop %v1206
        %v1223 = vmul.f32 1.0, %v1222
        %v1224 = vrcp.pop %v1207
        %v1225 = vmul.f32 1.0, %v1224
        %v1226 = vrcp.pop %v1208
        %v1227 = vmul.f32 1.0, %v1226
        %v1228 = vrcp.pop %v1209
        %v1229 = vmul.f32 1.0, %v1228
        %v1230 = vrcp.pop %v1210
        %v1231 = vmul.f32 1.0, %v1230
        %v1232 = vrcp.pop %v1211
        %v1233 = vmul.f32 1.0, %v1232
        %v1234 = vrcp.pop %v1212
        %v1235 = vmul.f32 1.0, %v1234
        %v1236 = vrcp.pop %v1213
        %v1237 = vmul.f32 1.0, %v1236
        %v1238 = vrcp.pop %v1214
        %v1239 = vmul.f32 1.0, %v1238
        %v1240 = vrcp.pop %v1215
        %v1241 = vmul.f32 1.0, %v1240
        %v1242 = vrcp.pop %v1216
        %v1243 = vmul.f32 1.0, %v1242
        %v1244 = vrcp.pop %v1217
        %v1245 = vmul.f32 1.0, %v1244
        %v1246 = vrcp.pop %v1218
        %v1247 = vmul.f32 1.0, %v1246
        %v1248 = vrcp.pop %v1219
        %v1249 = vmul.f32 1.0, %v1248
        %v1250 = vrcp.pop %v1220
        %v1251 = vmul.f32 1.0, %v1250
        %v1252 = vrcp.pop %v1221
        %v1253 = vmul.f32 1.0, %v1252
        %v1254 = vmul.f32 %v1223, %v1126
        %v1255 = vmul.f32 %v1225, %v1128
        %v1256 = vmul.f32 %v1227, %v1130
        %v1257 = vmul.f32 %v1229, %v1132
        %v1258 = vmul.f32 %v1231, %v1134
        %v1259 = vmul.f32 %v1233, %v1136
        %v1260 = vmul.f32 %v1235, %v1138
        %v1261 = vmul.f32 %v1237, %v1140
        %v1262 = vmul.f32 %v1239, %v1142
        %v1263 = vmul.f32 %v1241, %v1144
        %v1264 = vmul.f32 %v1243, %v1146
        %v1265 = vmul.f32 %v1245, %v1148
        %v1266 = vmul.f32 %v1247, %v1150
        %v1267 = vmul.f32 %v1249, %v1152
        %v1268 = vmul.f32 %v1251, %v1154
        %v1269 = vmul.f32 %v1253, %v1156
        %1270 = vst [vmem:[%s332] sm:$0xff] %v1254
        %1271 = vst [vmem:[%s332 + $0x8] sm:$0xff] %v1255
        %1272 = vst [vmem:[%s332 + $0x10] sm:$0xff] %v1256
        %1273 = vst [vmem:[%s332 + $0x18] sm:$0xff] %v1257
        %1274 = vst [vmem:[%s332 + $0x20] sm:$0xff] %v1258
        %1275 = vst [vmem:[%s332 + $0x28] sm:$0xff] %v1259
        %1276 = vst [vmem:[%s332 + $0x30] sm:$0xff] %v1260
        %1277 = vst [vmem:[%s332 + $0x38] sm:$0xff] %v1261
        %1278 = vst [vmem:[%s332 + $0x40] sm:$0xff] %v1262
        %1279 = vst [vmem:[%s332 + $0x48] sm:$0xff] %v1263
        %1280 = vst [vmem:[%s332 + $0x50] sm:$0xff] %v1264
        %1281 = vst [vmem:[%s332 + $0x58] sm:$0xff] %v1265
        %1282 = vst [vmem:[%s332 + $0x60] sm:$0xff] %v1266
        %1283 = vst [vmem:[%s332 + $0x68] sm:$0xff] %v1267
        %1284 = vst [vmem:[%s332 + $0x70] sm:$0xff] %v1268
        %1285 = vst [vmem:[%s332 + $0x78] sm:$0xff] %v1269
        %1286 = vst [vmem:[%s363] sm:$0xff] %v1254
        %1287 = vst [vmem:[%s363 + $0x8] sm:$0xff] %v1255
        %1288 = vst [vmem:[%s363 + $0x10] sm:$0xff] %v1256
        %1289 = vst [vmem:[%s363 + $0x18] sm:$0xff] %v1257
        %1290 = vst [vmem:[%s363 + $0x20] sm:$0xff] %v1258
        %1291 = vst [vmem:[%s363 + $0x28] sm:$0xff] %v1259
        %1292 = vst [vmem:[%s363 + $0x30] sm:$0xff] %v1260
        %1293 = vst [vmem:[%s363 + $0x38] sm:$0xff] %v1261
        %1294 = vst [vmem:[%s363 + $0x40] sm:$0xff] %v1262
        %1295 = vst [vmem:[%s363 + $0x48] sm:$0xff] %v1263
        %1296 = vst [vmem:[%s363 + $0x50] sm:$0xff] %v1264
        %1297 = vst [vmem:[%s363 + $0x58] sm:$0xff] %v1265
        %1298 = vst [vmem:[%s363 + $0x60] sm:$0xff] %v1266
        %1299 = vst [vmem:[%s363 + $0x68] sm:$0xff] %v1267
        %1300 = vst [vmem:[%s363 + $0x70] sm:$0xff] %v1268
        %1301 = vst [vmem:[%s363 + $0x78] sm:$0xff] %v1269
        %s1302 = sand.u32 %s193, 1
        %s1303 = scalar_lea.sflag [#allocation3], %s1302
        %s1304 = sand.u32 %s193, 1
        %s1305 = smul.addr %s1304, 128
        %s1306 = scalar_lea.vmem [#allocation2], %s1305
        %s1307 = smul.u32 16, %s23
        %p1308 = scmp.lt.s32.totalorder %s1307, 31
        %s1309 = scalar_select %p1308, %s1307, 31
        %s1310 = smul.addr %s1309, 8
        %s1311 = scalar_lea.vmem %s8, %s1310
        // Predicated region
        $region49: #{mpnn_forward.2} parent=47 // pred_check
          %p1312 = pneg %p203
        $region50: #{mpnn_forward.2} parent=47 // pred_check_branch
          %1314 = sbr.rel (%p1312) target = $region52
        $region51: #{mpnn_forward.2} parent=47 // pred_region
          %s1315 = smul.u32 16, %s23
          %s1317 = ssub.s32 2048, 2048
          %1318 = vsyncadd %s1303, %s1317
          %s1319 = smul.addr %s1315, 128
          %s1320 = scalar_lea.hbm %s7, %s1319
          %s1321 = sshll.u32 %s1306, 4
          %s1322 = int_to_ptr.vmem [resolvable:$true] %s1321
          %1327 = dma.vmem_to_hbm [thread:$0]  %s1322, 2048, %s1320, %s1303, 128, 128, 8
        $region52: #{mpnn_forward.2} parent=47 // pred_fallthru
          _
        // Predicated region
        $region53: #{mpnn_forward.2} parent=47 // pred_check
          %p1328 = pneg %p229
        $region54: #{mpnn_forward.2} parent=47 // pred_check_branch
          %1330 = sbr.rel (%p1328) target = $region56
        $region55: #{mpnn_forward.2} parent=47 // pred_region
          %s1331 = smul.u32 16, %s23
        $region56: #{mpnn_forward.2} parent=47 // pred_fallthru
          _
      $region48: #{mpnn_forward.2} parent=5 // pred_fallthru
        _
      %p1332 = scmp.le.s32.totalorder 2, %s18
      // Predicated region
      $region57: #{mpnn_forward.2} parent=5 // pred_check
        %p1333 = pneg %p1332
      $region58: #{mpnn_forward.2} parent=5 // pred_check_branch
        %1335 = sbr.rel (%p1333) target = $region60
      $region59: #{mpnn_forward.2} parent=5 // pred_region
        %s1336 = ssub.s32 %s18, 2
        // Predicated region
        $region61: #{mpnn_forward.2} parent=59 // pred_check
          %p1337 = pneg %p209
        $region62: #{mpnn_forward.2} parent=59 // pred_check_branch
          %1339 = sbr.rel (%p1337) target = $region64
        $region63: #{mpnn_forward.2} parent=59 // pred_region
          %s1340 = sand.u32 %s194, 1
          %s1341 = scalar_lea.sflag [#allocation3], %s1340
          %s1342 = sand.u32 %s194, 1
          %s1343 = smul.addr %s1342, 128
          %s1344 = scalar_lea.vmem [#allocation2], %s1343
          %1345 = dma.done %s1341, 2048
        $region64: #{mpnn_forward.2} parent=59 // pred_fallthru
          _
        // Predicated region
        $region65: #{mpnn_forward.2} parent=59 // pred_check
          %p1346 = pneg %p235
        $region66: #{mpnn_forward.2} parent=59 // pred_check_branch
          %1348 = sbr.rel (%p1346) target = $region68
        $region67: #{mpnn_forward.2} parent=59 // pred_region
          %s1349 = smul.u32 16, %s24
          %p1350 = scmp.lt.s32.totalorder %s1349, 31
          %s1351 = scalar_select %p1350, %s1349, 31
          %s1352 = smul.addr %s1351, 8
          %s1353 = scalar_lea.vmem %s8, %s1352
        $region68: #{mpnn_forward.2} parent=59 // pred_fallthru
          _
      $region60: #{mpnn_forward.2} parent=5 // pred_fallthru
        _
    $region6: #{mpnn_forward.2} parent=1 // loop_footer
      %s22 = sadd.s32 1, %s18
    $region7: #{mpnn_forward.2} parent=1 // loop_footer_branch
      %17 = sbr.rel target = $region3
    $region8: #{mpnn_forward.2} parent=1 // loop_exit
      _
    %1354 = vsyncpa [#allocation3], 1
    %s1355 = scalar_lea.sflag [#allocation3], 1
    %1356 = vsyncpa %s1355, 1

</llo_original>
